<compile_context>
chip_gen: v7x
topology: tpu7x:2x2x1
jax: 0.10.0
libtpu: 0.0.40
codegen_flags: <defaults>
</compile_context>

<pallas_src>
import jax
import jax.numpy as jnp
import numpy as np
from jax.experimental import pallas as pl
from jax.experimental.pallas import tpu as pltpu


# ----------------------------------------------------------------------------
# Pallas kernel
# ----------------------------------------------------------------------------
def make_node_score_kernel(depth, seg, nfeat, nout_pad, matmul_dtype):
    """seg[name] = (row_offset, rows, cols) into the packed weight slab."""
    md = matmul_dtype

    def kernel(x_ref, adj_ref, w_ref, out_ref):
        G, N, nfx = x_ref.shape                       # nfx == nfeat + 1 (flags col)

        def wslice(name, cols=None):
            off, r, c = seg[name]                     # static Python ints
            return w_ref[off:off + r, :(c if cols is None else cols)]

        adj = adj_ref[...].astype(md)                 # (G,N,N) {0,1}, self loops
        xf = x_ref[...]
        flg = xf[:, :, nfeat:nfx].reshape(G * N, 1)   # node mask, f32

        # D^-1/2 recomputed in-kernel: lane-axis row-sum (XLU) + rsqrt (EUP).
        # {0,1} entries summed with f32 accumulation -> exact degrees.
        deg = jnp.sum(adj.reshape(G * N, N), axis=-1, keepdims=True,
                      dtype=jnp.float32).reshape(G, N, 1)
        d = jax.lax.rsqrt(jnp.maximum(deg, 1.0))      # (G,N,1) f32
        d_md = d.astype(md)

        # features cast to the matmul dtype once; reused by GCN + skip dots
        h = xf[:, :, :nfeat].reshape(G * N, nfeat).astype(md)

        # running first-MLP accumulator (replaces feats list / lane concat)
        y = wslice("b1") + jnp.dot(h, wslice("w1_0").astype(md),
                                   preferred_element_type=jnp.float32)

        for l in range(depth):
            w = wslice(f"gcn_w{l}").astype(md)
            b = wslice(f"gcn_b{l}")                                  # (1, nhid) f32
            hw = jnp.dot(h, w, preferred_element_type=jnp.float32)   # (G*N, nhid)
            hw3 = hw.reshape(G, N, hw.shape[-1])
            # D^-1/2 A D^-1/2 @ (hW)  ==  d * (A_sl @ (d * hW))
            agg = d * jnp.einsum("gij,gjh->gih", adj, d_md * hw3.astype(md),
                                 preferred_element_type=jnp.float32)
            h = jnp.tanh(agg + b).astype(md).reshape(G * N, hw.shape[-1])
            y = y + jnp.dot(h, wslice(f"w1_{l + 1}").astype(md),
                            preferred_element_type=jnp.float32)

        # MLP tail: silu -> Linear -> silu -> Linear.
        # w3/b3 sliced with zero-padded lanes so the store is lane-dense.
        y = y * jax.nn.sigmoid(y)
        y = jnp.dot(y.astype(md), wslice("w2").astype(md),
                    preferred_element_type=jnp.float32) + wslice("b2")
        y = y * jax.nn.sigmoid(y)
        y = jnp.dot(y.astype(md), wslice("w3", cols=nout_pad).astype(md),
                    preferred_element_type=jnp.float32) + wslice("b3", cols=nout_pad)

        out_ref[...] = (y * flg).astype(out_ref.dtype)

    return kernel


# ----------------------------------------------------------------------------
# Weight packing: one zero-padded f32 slab (rows->8, lanes->128)
# ----------------------------------------------------------------------------
def pack_weights(params, depth, nfeat, nhid):
    segs = []

    def add(name, arr):
        arr = jnp.asarray(arr, jnp.float32)
        if arr.ndim == 1:
            arr = arr.reshape(1, -1)
        segs.append((name, arr))

    for l in range(depth):
        add(f"gcn_w{l}", params[f"gcn_w{l}"])
        add(f"gcn_b{l}", params[f"gcn_b{l}"])
    # split w1 by rows so the kernel never concatenates along the lane axis
    w1 = jnp.asarray(params["w1"], jnp.float32)
    splits = [nfeat] + [nhid] * depth
    off = 0
    for i, r in enumerate(splits):
        add(f"w1_{i}", w1[off:off + r, :])
        off += r
    add("b1", params["b1"])
    add("w2", params["w2"])
    add("b2", params["b2"])
    add("w3", params["w3"])
    add("b3", params["b3"])

    width = max(a.shape[1] for _, a in segs)
    width = ((width + 127) // 128) * 128
    seg_info = {}
    blocks = []
    row = 0
    for name, a in segs:
        r, c = a.shape
        rp = ((r + 7) // 8) * 8
        seg_info[name] = (row, r, c)
        blk = jnp.zeros((rp, width), jnp.float32).at[:r, :c].set(a)
        blocks.append(blk)
        row += rp
    return jnp.concatenate(blocks, axis=0), seg_info


# ----------------------------------------------------------------------------
# Wrapper
# ----------------------------------------------------------------------------
def node_score_network_dense(x, adj, flags, params, depth,
                             graphs_per_step=2, matmul_dtype=jnp.bfloat16):
    B, N, nfeat = x.shape
    nhid = params["gcn_w0"].shape[1]
    nout = params["w3"].shape[1]
    hidden = params["w1"].shape[1]
    G = graphs_per_step
    assert B % G == 0, "batch must be divisible by graphs_per_step"
    assert (G * N) % 8 == 0 or G == B, "G*N must be a multiple of 8"

    x = x.astype(jnp.float32)
    adj = adj.astype(jnp.float32)

    # ---- normalisation hoisted into XLA -------------------------------------
    eye = jnp.eye(N, dtype=jnp.float32)
    adj_sl = adj * (1.0 - eye) + eye                   # force self loops
    # NOTE: int8 path assumes a binary {0,1} adjacency (true for this module);
    # weighted adjacencies would be truncated here.
    adj_i8 = adj_sl.astype(jnp.int8)                   # 4x less adj DMA
    # flags ride along as one extra feature column; D^-1/2 recomputed in-kernel
    x_aug = jnp.concatenate(
        [x, flags.astype(jnp.float32)[:, :, None]], axis=-1)   # (B, N, nfeat+1)

    slab, seg_info = pack_weights(params, depth, nfeat, nhid)
    nout_pad = ((nout + 127) // 128) * 128
    kernel = make_node_score_kernel(depth, seg_info, nfeat, nout_pad, matmul_dtype)

    # rough per-step VMEM budget -> explicit scoped limit (kept under v7x 64 MiB)
    mdb = jnp.dtype(matmul_dtype).itemsize
    est = (2 * (G * N * (nfeat + 1) * 4 + G * N * N)          # double-buffered in
           + 2 * G * N * nout_pad * 4                          # double-buffered out
           + 2 * slab.size * 4                                 # weight slab
           + G * N * N * (mdb + 4)                             # adj md copy + reduce
           + G * N * (2 * nhid + 4 * hidden) * 4)              # activations
    vmem_limit = int(min(max(4 * est, 32 << 20), 60 << 20))

    fdim = nfeat + depth * nhid
    flops = 2 * B * N * (nfeat * nhid + max(depth - 1, 0) * nhid * nhid
                         + depth * N * nhid
                         + fdim * hidden + hidden * hidden + hidden * nout)
    transc = B * N * (depth * nhid + 2 * hidden + depth)
    bytes_acc = int(adj_i8.size + x_aug.size * 4 + slab.size * 4
                    + B * N * nout_pad * 4)

    out2d = pl.pallas_call(
        kernel,
        out_shape=jax.ShapeDtypeStruct((B * N, nout_pad), jnp.float32),
        grid=(B // G,),
        in_specs=[
            pl.BlockSpec((G, N, nfeat + 1), lambda b: (b, 0, 0)),  # x + flags col
            pl.BlockSpec((G, N, N), lambda b: (b, 0, 0)),          # adj_sl (int8)
            # grid-invariant index_map -> the pipeliner does not re-DMA the slab
            pl.BlockSpec(slab.shape, lambda b: (0, 0)),
        ],
        out_specs=pl.BlockSpec((G * N, nout_pad), lambda b: (b, 0)),
        compiler_params=pltpu.CompilerParams(
            dimension_semantics=("parallel",),
            vmem_limit_bytes=vmem_limit),
        cost_estimate=pl.CostEstimate(flops=int(flops),
                                      transcendentals=int(transc),
                                      bytes_accessed=bytes_acc),
        # NOTE: for production-scale N (>~1k) add a node-row grid axis for
        # adj/x/out and shrink G; on v5e consider Buffered(3) on the adj stream.
    )(x_aug, adj_i8, slab)

    return out2d[:, :nout].reshape(B, N, nout)


# ----------------------------------------------------------------------------
# Deterministic parameter init (shapes match the torch module)
# ----------------------------------------------------------------------------
def init_params(key, nfeat, depth, nhid, nout):
    fdim = nfeat + depth * nhid
    hidden = 2 * fdim
    params = {}
    keys = jax.random.split(key, depth + 3)
    fin = nfeat
    for l in range(depth):
        params[f"gcn_w{l}"] = (
            jax.random.normal(keys[l], (fin, nhid), jnp.float32)
            / jnp.sqrt(jnp.float32(fin)))
        params[f"gcn_b{l}"] = jnp.zeros((nhid,), jnp.float32)
        fin = nhid
    dims = [(fdim, hidden), (hidden, hidden), (hidden, nout)]
    for i, (din, dout) in enumerate(dims, start=1):
        params[f"w{i}"] = (
            jax.random.normal(keys[depth + i - 1], (din, dout), jnp.float32)
            / jnp.sqrt(jnp.float32(din)))
        params[f"b{i}"] = jnp.zeros((dout,), jnp.float32)
    return params


# ----------------------------------------------------------------------------
# Pure-JAX reference (mirrors the PyTorch forward)
# ----------------------------------------------------------------------------
def reference(x, adj, flags, params, depth):
    B, N, _ = adj.shape
    eye = jnp.eye(N, dtype=adj.dtype)
    adj_sl = adj * (1.0 - eye) + eye
    deg = jnp.maximum(adj_sl.sum(-1), 1.0)
    d = deg ** -0.5
    adj_norm = d[:, :, None] * adj_sl * d[:, None, :]
    h = x
    feats = [x]
    for l in range(depth):
        hw = jnp.einsum("bnf,fh->bnh", h, params[f"gcn_w{l}"])
        h = jnp.einsum("bij,bjh->bih", adj_norm, hw) + params[f"gcn_b{l}"]
        h = jnp.tanh(h)
        feats.append(h)
    xs = jnp.concatenate(feats, axis=-1)
    y = jax.nn.silu(xs @ params["w1"] + params["b1"])
    y = jax.nn.silu(y @ params["w2"] + params["b2"])
    y = y @ params["w3"] + params["b3"]
    return y * flags[:, :, None]


# ----------------------------------------------------------------------------
if __name__ == "__main__":
    B, N = 8, 16
    nfeat, depth, nhid, nout = 4, 2, 8, 4
    G = 2                                  # B // G == 4 steps (>= 2 per TC on v7x)

    key = jax.random.PRNGKey(0)
    kx, kadj, kparam = jax.random.split(key, 3)

    x = jax.random.normal(kx, (B, N, nfeat), jnp.float32)
    a = (jax.random.uniform(kadj, (B, N, N)) < 0.3).astype(jnp.float32)
    adj = jnp.triu(a, 1)
    adj = adj + jnp.transpose(adj, (0, 2, 1))       # symmetric, zero diag, {0,1}
    flags = jnp.ones((B, N), jnp.float32)
    flags = flags.at[1, N - 3:].set(0.0).at[3, :2].set(0.0)

    params = init_params(kparam, nfeat, depth, nhid, nout)
    ref = reference(x, adj, flags, params, depth)

    # f32 MXU operands: tight correctness check against the pure-JAX reference.
    out_f32 = node_score_network_dense(
        x, adj, flags, params, depth,
        graphs_per_step=G, matmul_dtype=jnp.float32)
    out_f32 = jax.block_until_ready(out_f32)
    assert out_f32.shape == (B, N, nout)
    np.testing.assert_allclose(np.asarray(out_f32), np.asarray(ref),
                               rtol=2e-3, atol=2e-3)

    # bf16 MXU operands (f32 accumulation): fast path for v6e/v7x; loose check.
    out_bf16 = node_score_network_dense(
        x, adj, flags, params, depth,
        graphs_per_step=G, matmul_dtype=jnp.bfloat16)
    out_bf16 = jax.block_until_ready(out_bf16)
    np.testing.assert_allclose(np.asarray(out_bf16), np.asarray(ref),
                               rtol=1e-1, atol=1e-1)

    print("KERNEL_OK")
</pallas_src>

<mosaic_0001>
module attributes {stable_mosaic.version = 11 : i64} {
  func.func @kernel(%arg0: i32, %arg1: memref<2x16x5xf32, #tpu.memory_space<vmem>>, %arg2: memref<2x16x16xi8, #tpu.memory_space<vmem>>, %arg3: memref<160x128xf32, #tpu.memory_space<vmem>>, %arg4: memref<32x128xf32, #tpu.memory_space<vmem>>) attributes {dimension_semantics = [#tpu.dimension_semantics<parallel>], iteration_bounds = array<i64: 4>, scalar_prefetch = 0 : i64, scratch_operands = 0 : i64, tpu.core_type = #tpu.core_type<tc>, window_params = [{transform_indices = @transform_0, window_bounds = array<i64: 2, 16, 5>}, {transform_indices = @transform_1, window_bounds = array<i64: 2, 16, 16>}, {pipeline_mode = #tpu.pipeline_mode<synchronous>, transform_indices = @transform_2, window_bounds = array<i64: 160, 128>}, {transform_indices = @transform_3, window_bounds = array<i64: 32, 128>}]} {
    %c0 = arith.constant 0 : index
    %c0_0 = arith.constant 0 : index
    %c0_1 = arith.constant 0 : index
    %0 = vector.load %arg2[%c0, %c0_0, %c0_1] : memref<2x16x16xi8, #tpu.memory_space<vmem>>, vector<2x16x16xi8>
    %1 = arith.sitofp %0 : vector<2x16x16xi8> to vector<2x16x16xf32>
    %c0_2 = arith.constant 0 : index
    %c0_3 = arith.constant 0 : index
    %c0_4 = arith.constant 0 : index
    %2 = vector.load %arg1[%c0_2, %c0_3, %c0_4] : memref<2x16x5xf32, #tpu.memory_space<vmem>>, vector<2x16x5xf32>
    %3 = vector.extract_strided_slice %2 {offsets = [0, 0, 4], sizes = [2, 16, 1], strides = [1, 1, 1]} : vector<2x16x5xf32> to vector<2x16x1xf32>
    %4 = vector.shape_cast %3 : vector<2x16x1xf32> to vector<32x1xf32>
    %5 = vector.shape_cast %1 : vector<2x16x16xf32> to vector<32x16xf32>
    %cst = arith.constant dense<0.000000e+00> : vector<32xf32>
    %6 = vector.multi_reduction <add>, %5, %cst [1] : vector<32x16xf32> to vector<32xf32>
    %7 = vector.shape_cast %6 : vector<32xf32> to vector<32x1xf32>
    %8 = vector.shape_cast %7 : vector<32x1xf32> to vector<2x16x1xf32>
    %cst_5 = arith.constant 1.000000e+00 : f32
    %9 = vector.broadcast %cst_5 : f32 to vector<2x16x1xf32>
    %10 = arith.maximumf %8, %9 : vector<2x16x1xf32>
    %11 = math.rsqrt %10 : vector<2x16x1xf32>
    %12 = vector.extract_strided_slice %2 {offsets = [0, 0, 0], sizes = [2, 16, 4], strides = [1, 1, 1]} : vector<2x16x5xf32> to vector<2x16x4xf32>
    %13 = vector.shape_cast %12 : vector<2x16x4xf32> to vector<32x4xf32>
    %c56 = arith.constant 56 : index
    %c0_6 = arith.constant 0 : index
    %14 = vector.load %arg3[%c56, %c0_6] : memref<160x128xf32, #tpu.memory_space<vmem>>, vector<1x40xf32>
    %c32 = arith.constant 32 : index
    %c0_7 = arith.constant 0 : index
    %15 = vector.load %arg3[%c32, %c0_7] : memref<160x128xf32, #tpu.memory_space<vmem>>, vector<4x40xf32>
    %cst_8 = arith.constant dense<0.000000e+00> : vector<32x40xf32>
    %16 = tpu.matmul %13, %15, %cst_8 {dimension_numbers = #tpu.dot_dimension_numbers<[1], [0], [0], [1], [0, 0, 1, 1], [], []>} : vector<32x4xf32>, vector<4x40xf32>, vector<32x40xf32> -> vector<32x40xf32>
    %17 = vector.broadcast %14 : vector<1x40xf32> to vector<32x40xf32>
    %18 = arith.addf %17, %16 : vector<32x40xf32>
    %c0_9 = arith.constant 0 : index
    %c0_10 = arith.constant 0 : index
    %19 = vector.load %arg3[%c0_9, %c0_10] : memref<160x128xf32, #tpu.memory_space<vmem>>, vector<4x8xf32>
    %c8 = arith.constant 8 : index
    %c0_11 = arith.constant 0 : index
    %20 = vector.load %arg3[%c8, %c0_11] : memref<160x128xf32, #tpu.memory_space<vmem>>, vector<1x8xf32>
    %cst_12 = arith.constant dense<0.000000e+00> : vector<32x8xf32>
    %21 = tpu.matmul %13, %19, %cst_12 {dimension_numbers = #tpu.dot_dimension_numbers<[1], [0], [0], [1], [0, 0, 1, 1], [], []>} : vector<32x4xf32>, vector<4x8xf32>, vector<32x8xf32> -> vector<32x8xf32>
    %22 = vector.shape_cast %21 : vector<32x8xf32> to vector<2x16x8xf32>
    %23 = vector.broadcast %11 : vector<2x16x1xf32> to vector<2x16x8xf32>
    %24 = arith.mulf %23, %22 : vector<2x16x8xf32>
    "tpu.trace_start"() <{level = 10 : i32, message = "gij,gjh->gih"}> : () -> ()
    %cst_13 = arith.constant dense<0.000000e+00> : vector<2x16x8xf32>
    %25 = tpu.matmul %1, %24, %cst_13 {dimension_numbers = #tpu.dot_dimension_numbers<[2], [1], [1], [2], [0, 0, 0, 1, 1, 2], [0], [0]>} : vector<2x16x16xf32>, vector<2x16x8xf32>, vector<2x16x8xf32> -> vector<2x16x8xf32>
    "tpu.trace_stop"() : () -> ()
    %26 = vector.broadcast %11 : vector<2x16x1xf32> to vector<2x16x8xf32>
    %27 = arith.mulf %26, %25 : vector<2x16x8xf32>
    %28 = vector.shape_cast %20 : vector<1x8xf32> to vector<1x1x8xf32>
    %29 = vector.broadcast %28 : vector<1x1x8xf32> to vector<2x16x8xf32>
    %30 = arith.addf %27, %29 : vector<2x16x8xf32>
    %31 = math.tanh %30 : vector<2x16x8xf32>
    %32 = vector.shape_cast %31 : vector<2x16x8xf32> to vector<32x8xf32>
    %c40 = arith.constant 40 : index
    %c0_14 = arith.constant 0 : index
    %33 = vector.load %arg3[%c40, %c0_14] : memref<160x128xf32, #tpu.memory_space<vmem>>, vector<8x40xf32>
    %cst_15 = arith.constant dense<0.000000e+00> : vector<32x40xf32>
    %34 = tpu.matmul %32, %33, %cst_15 {dimension_numbers = #tpu.dot_dimension_numbers<[1], [0], [0], [1], [0, 0, 1, 1], [], []>} : vector<32x8xf32>, vector<8x40xf32>, vector<32x40xf32> -> vector<32x40xf32>
    %35 = arith.addf %18, %34 : vector<32x40xf32>
    %c16 = arith.constant 16 : index
    %c0_16 = arith.constant 0 : index
    %36 = vector.load %arg3[%c16, %c0_16] : memref<160x128xf32, #tpu.memory_space<vmem>>, vector<8x8xf32>
    %c24 = arith.constant 24 : index
    %c0_17 = arith.constant 0 : index
    %37 = vector.load %arg3[%c24, %c0_17] : memref<160x128xf32, #tpu.memory_space<vmem>>, vector<1x8xf32>
    %cst_18 = arith.constant dense<0.000000e+00> : vector<32x8xf32>
    %38 = tpu.matmul %32, %36, %cst_18 {dimension_numbers = #tpu.dot_dimension_numbers<[1], [0], [0], [1], [0, 0, 1, 1], [], []>} : vector<32x8xf32>, vector<8x8xf32>, vector<32x8xf32> -> vector<32x8xf32>
    %39 = vector.shape_cast %38 : vector<32x8xf32> to vector<2x16x8xf32>
    %40 = vector.broadcast %11 : vector<2x16x1xf32> to vector<2x16x8xf32>
    %41 = arith.mulf %40, %39 : vector<2x16x8xf32>
    "tpu.trace_start"() <{level = 10 : i32, message = "gij,gjh->gih"}> : () -> ()
    %cst_19 = arith.constant dense<0.000000e+00> : vector<2x16x8xf32>
    %42 = tpu.matmul %1, %41, %cst_19 {dimension_numbers = #tpu.dot_dimension_numbers<[2], [1], [1], [2], [0, 0, 0, 1, 1, 2], [0], [0]>} : vector<2x16x16xf32>, vector<2x16x8xf32>, vector<2x16x8xf32> -> vector<2x16x8xf32>
    "tpu.trace_stop"() : () -> ()
    %43 = vector.broadcast %11 : vector<2x16x1xf32> to vector<2x16x8xf32>
    %44 = arith.mulf %43, %42 : vector<2x16x8xf32>
    %45 = vector.shape_cast %37 : vector<1x8xf32> to vector<1x1x8xf32>
    %46 = vector.broadcast %45 : vector<1x1x8xf32> to vector<2x16x8xf32>
    %47 = arith.addf %44, %46 : vector<2x16x8xf32>
    %48 = math.tanh %47 : vector<2x16x8xf32>
    %49 = vector.shape_cast %48 : vector<2x16x8xf32> to vector<32x8xf32>
    %c48 = arith.constant 48 : index
    %c0_20 = arith.constant 0 : index
    %50 = vector.load %arg3[%c48, %c0_20] : memref<160x128xf32, #tpu.memory_space<vmem>>, vector<8x40xf32>
    %cst_21 = arith.constant dense<0.000000e+00> : vector<32x40xf32>
    %51 = tpu.matmul %49, %50, %cst_21 {dimension_numbers = #tpu.dot_dimension_numbers<[1], [0], [0], [1], [0, 0, 1, 1], [], []>} : vector<32x8xf32>, vector<8x40xf32>, vector<32x40xf32> -> vector<32x40xf32>
    %52 = arith.addf %35, %51 : vector<32x40xf32>
    %53 = arith.negf %52 : vector<32x40xf32>
    %54 = math.exp %53 : vector<32x40xf32>
    %cst_22 = arith.constant 1.000000e+00 : f32
    %55 = vector.broadcast %cst_22 : f32 to vector<32x40xf32>
    %56 = arith.addf %55, %54 : vector<32x40xf32>
    %57 = arith.divf %55, %56 : vector<32x40xf32>
    %58 = arith.mulf %52, %57 : vector<32x40xf32>
    %c64 = arith.constant 64 : index
    %c0_23 = arith.constant 0 : index
    %59 = vector.load %arg3[%c64, %c0_23] : memref<160x128xf32, #tpu.memory_space<vmem>>, vector<40x40xf32>
    %cst_24 = arith.constant dense<0.000000e+00> : vector<32x40xf32>
    %60 = tpu.matmul %58, %59, %cst_24 {dimension_numbers = #tpu.dot_dimension_numbers<[1], [0], [0], [1], [0, 0, 1, 1], [], []>} : vector<32x40xf32>, vector<40x40xf32>, vector<32x40xf32> -> vector<32x40xf32>
    %c104 = arith.constant 104 : index
    %c0_25 = arith.constant 0 : index
    %61 = vector.load %arg3[%c104, %c0_25] : memref<160x128xf32, #tpu.memory_space<vmem>>, vector<1x40xf32>
    %62 = vector.broadcast %61 : vector<1x40xf32> to vector<32x40xf32>
    %63 = arith.addf %60, %62 : vector<32x40xf32>
    %64 = arith.negf %63 : vector<32x40xf32>
    %65 = math.exp %64 : vector<32x40xf32>
    %cst_26 = arith.constant 1.000000e+00 : f32
    %66 = vector.broadcast %cst_26 : f32 to vector<32x40xf32>
    %67 = arith.addf %66, %65 : vector<32x40xf32>
    %68 = arith.divf %66, %67 : vector<32x40xf32>
    %69 = arith.mulf %63, %68 : vector<32x40xf32>
    %c112 = arith.constant 112 : index
    %c0_27 = arith.constant 0 : index
    %70 = vector.load %arg3[%c112, %c0_27] : memref<160x128xf32, #tpu.memory_space<vmem>>, vector<40x128xf32>
    %cst_28 = arith.constant dense<0.000000e+00> : vector<32x128xf32>
    %71 = tpu.matmul %69, %70, %cst_28 {dimension_numbers = #tpu.dot_dimension_numbers<[1], [0], [0], [1], [0, 0, 1, 1], [], []>} : vector<32x40xf32>, vector<40x128xf32>, vector<32x128xf32> -> vector<32x128xf32>
    %c152 = arith.constant 152 : index
    %c0_29 = arith.constant 0 : index
    %72 = vector.load %arg3[%c152, %c0_29] : memref<160x128xf32, #tpu.memory_space<vmem>>, vector<1x128xf32>
    %73 = vector.broadcast %72 : vector<1x128xf32> to vector<32x128xf32>
    %74 = arith.addf %71, %73 : vector<32x128xf32>
    %75 = vector.broadcast %4 : vector<32x1xf32> to vector<32x128xf32>
    %76 = arith.mulf %74, %75 : vector<32x128xf32>
    %c0_30 = arith.constant 0 : index
    %c0_31 = arith.constant 0 : index
    %77 = vector.load %arg4[%c0_30, %c0_31] : memref<32x128xf32, #tpu.memory_space<vmem>>, vector<32x128xf32>
    tpu.vector_store %arg4[%c0_30, %c0_31], %76 {strides = array<i32>} : memref<32x128xf32, #tpu.memory_space<vmem>>, vector<32x128xf32>,
    return
  }
  func.func @transform_0(%arg0: i32) -> (i32, i32, i32) {
    %c0_i32 = arith.constant 0 : i32
    %c0_i32_0 = arith.constant 0 : i32
    %c0_i32_1 = arith.constant 0 : i32
    return %arg0, %c0_i32, %c0_i32_0 : i32, i32, i32
  }
  func.func @transform_1(%arg0: i32) -> (i32, i32, i32) {
    %c0_i32 = arith.constant 0 : i32
    %c0_i32_0 = arith.constant 0 : i32
    %c0_i32_1 = arith.constant 0 : i32
    return %arg0, %c0_i32, %c0_i32_0 : i32, i32, i32
  }
  func.func @transform_2(%arg0: i32) -> (i32, i32) {
    %c0_i32 = arith.constant 0 : i32
    %c0_i32_0 = arith.constant 0 : i32
    %c0_i32_1 = arith.constant 0 : i32
    return %c0_i32, %c0_i32_0 : i32, i32
  }
  func.func @transform_3(%arg0: i32) -> (i32, i32) {
    %c0_i32 = arith.constant 0 : i32
    %c0_i32_0 = arith.constant 0 : i32
    return %arg0, %c0_i32 : i32, i32
  }
}

</mosaic_0001>

<llo_original>
// kernel: tpu_custom_call.1
$region0: #{tpu_custom_call.1}
  #allocation0 [shape = 'u32[]', space=smem, size = 0x4, offset = 0x4, fixed_abs, tag = 'smem constant byte address 0x4 - core index']
  #allocation1 [shape = 'u32[144,128]{1,0:T(1,128)}', space=vmem, size = 0x12000, scoped, tag = 'internal scratch']
  %s0 = inlined_call_operand.vmem [shape: f32[8,16,5], index: 0, kind: input, shape index: {}]
  %s1 = inlined_call_operand.hbm [shape: s8[8,16,16], index: 1, kind: input, shape index: {}]
  %s2 = inlined_call_operand.vmem [shape: f32[160,128], index: 2, kind: input, shape index: {}]
  %s3 = inlined_call_operand.hbm [shape: f32[128,128], index: 3, kind: output, shape index: {}]
  %s4 = sld [smem:[#allocation0]]
  $region49: #{tpu_custom_call.1} parent=0
    _
  %s6 = ssub.s32 1, %s4
  %s7 = scalar_select 0, %s6, %s4
  $region1: #{tpu_custom_call.1} parent=0
    #allocation2 [shape = 'u8[8192]{0}', space=vmem, size = 0x2000, scoped, tag = 'input window, operand 1']
    #allocation3 [shape = 's32[2]{0}', space=sflag, size = 0x8, scoped, tag = 'scoped memory for tpu_custom_call.1']
    #allocation4 [shape = 's32[2]{0}', space=sflag, size = 0x8, scoped, tag = 'scoped memory for tpu_custom_call.1']
    #allocation5 [shape = 'u8[32768]{0}', space=vmem, size = 0x8000, scoped, tag = 'output window, operand 0']
    %8 = vsyncpa [#allocation3], 0
    %s9 = scalar_lea.sflag [#allocation3], 1
    %10 = vsyncpa %s9, 0
    %11 = vsyncpa [#allocation4], 0
    %s12 = scalar_lea.sflag [#allocation4], 1
    %13 = vsyncpa %s12, 0
    loop: start=0, step=1, limit=6
    $region2: #{tpu_custom_call.1} parent=1 // loop_pre_header
      _
    $region3: #{tpu_custom_call.1} parent=1 // loop_header
      %s15 = sphi 0, %s19
      %p16 = scmp.ge.s32.totalorder %s15, 6
      %s25 = sphi 0, %s27
      %s28 = sphi 0, %s25
      %s29 = sphi 0, %s28
      %s45 = sphi 0, %s29
      %s51 = sphi 0, %s53
      %s54 = sphi 0, %s51
      %s55 = sphi 0, %s54
      %s71 = sphi 0, %s55
      %s75 = sphi 0, %s75
      %s77 = sphi 0, %s75
      %s78 = sphi 0, %s77
      %s92 = sphi 0, %s78
      %s98 = sphi 0, %s100
      %s101 = sphi 0, %s98
      %s102 = sphi 0, %s101
      %s118 = sphi 0, %s102
    $region4: #{tpu_custom_call.1} parent=1 // loop_header_branch
      %18 = sbr.rel (%p16) target = $region8
    $region5: #{tpu_custom_call.1} parent=1 // loop_body
      %s20 = ssub.s32 %s15, 1
      %s21 = ssub.s32 %s15, 2
      %s22 = sadd.s32 %s15, 1
      %s23 = ssub.s32 %s15, %s22
      %p24 = scmp.eq.s32.totalorder %s23, 0
      %s26 = sadd.s32 %s25, 1
      %s27 = scalar_select %p24, %s25, %s26
      %p30 = pneg %p24
      %p31 = scmp.eq.s32.totalorder %s15, 3
      %p32 = por %p30, %p31
      %p33 = scmp.ne.s32.totalorder %s25, %s28
      %p34 = scmp.eq.s32.totalorder %s15, 0
      %p35 = por %p33, %p34
      %p36 = scmp.ne.s32.totalorder %s25, %s28
      %p37 = scmp.eq.s32.totalorder %s20, 3
      %p38 = por %p36, %p37
      %p39 = scmp.ne.s32.totalorder %s28, %s29
      %p40 = scmp.eq.s32.totalorder %s20, 0
      %p41 = por %p39, %p40
      %p42 = scmp.ne.s32.totalorder %s28, %s29
      %p43 = scmp.eq.s32.totalorder %s21, 3
      %p44 = por %p42, %p43
      %p46 = scmp.ne.s32.totalorder %s29, %s45
      %p47 = scmp.eq.s32.totalorder %s21, 0
      %p48 = por %p46, %p47
      %s49 = ssub.s32 %s15, %s22
      %p50 = scmp.eq.s32.totalorder %s49, 0
      %s52 = sadd.s32 %s51, 1
      %s53 = scalar_select %p50, %s51, %s52
      %p56 = pneg %p50
      %p57 = scmp.eq.s32.totalorder %s15, 3
      %p58 = por %p56, %p57
      %p59 = scmp.ne.s32.totalorder %s51, %s54
      %p60 = scmp.eq.s32.totalorder %s15, 0
      %p61 = por %p59, %p60
      %p62 = scmp.ne.s32.totalorder %s51, %s54
      %p63 = scmp.eq.s32.totalorder %s20, 3
      %p64 = por %p62, %p63
      %p65 = scmp.ne.s32.totalorder %s54, %s55
      %p66 = scmp.eq.s32.totalorder %s20, 0
      %p67 = por %p65, %p66
      %p68 = scmp.ne.s32.totalorder %s54, %s55
      %p69 = scmp.eq.s32.totalorder %s21, 3
      %p70 = por %p68, %p69
      %p72 = scmp.ne.s32.totalorder %s55, %s71
      %p73 = scmp.eq.s32.totalorder %s21, 0
      %p74 = por %p72, %p73
      %s76 = sadd.s32 %s75, 1
      %p79 = scmp.eq.s32.totalorder %s15, 3
      %p80 = scmp.ne.s32.totalorder %s75, %s77
      %p81 = scmp.eq.s32.totalorder %s15, 0
      %p82 = por %p80, %p81
      %p83 = scmp.ne.s32.totalorder %s75, %s77
      %p84 = scmp.eq.s32.totalorder %s20, 3
      %p85 = por %p83, %p84
      %p86 = scmp.ne.s32.totalorder %s77, %s78
      %p87 = scmp.eq.s32.totalorder %s20, 0
      %p88 = por %p86, %p87
      %p89 = scmp.ne.s32.totalorder %s77, %s78
      %p90 = scmp.eq.s32.totalorder %s21, 3
      %p91 = por %p89, %p90
      %p93 = scmp.ne.s32.totalorder %s78, %s92
      %p94 = scmp.eq.s32.totalorder %s21, 0
      %p95 = por %p93, %p94
      %s96 = ssub.s32 %s15, %s22
      %p97 = scmp.eq.s32.totalorder %s96, 0
      %s99 = sadd.s32 %s98, 1
      %s100 = scalar_select %p97, %s98, %s99
      %p103 = pneg %p97
      %p104 = scmp.eq.s32.totalorder %s15, 3
      %p105 = por %p103, %p104
      %p106 = scmp.ne.s32.totalorder %s98, %s101
      %p107 = scmp.eq.s32.totalorder %s15, 0
      %p108 = por %p106, %p107
      %p109 = scmp.ne.s32.totalorder %s98, %s101
      %p110 = scmp.eq.s32.totalorder %s20, 3
      %p111 = por %p109, %p110
      %p112 = scmp.ne.s32.totalorder %s101, %s102
      %p113 = scmp.eq.s32.totalorder %s20, 0
      %p114 = por %p112, %p113
      %p115 = scmp.ne.s32.totalorder %s101, %s102
      %p116 = scmp.eq.s32.totalorder %s21, 3
      %p117 = por %p115, %p116
      %p119 = scmp.ne.s32.totalorder %s102, %s118
      %p120 = scmp.eq.s32.totalorder %s21, 0
      %p121 = por %p119, %p120
      %p122 = scmp.le.s32.totalorder 1, %s15
      %p123 = scmp.lt.s32.totalorder %s15, 5
      %p124 = pnand %p122, %p123
      %p125 = pneg %p124
      // Predicated region
      $region9: #{tpu_custom_call.1} parent=5 // pred_check
        _
      $region10: #{tpu_custom_call.1} parent=5 // pred_check_branch
        %127 = sbr.rel (%p124) target = $region12
      $region11: #{tpu_custom_call.1} parent=5 // pred_region
        %s128 = ssub.s32 %s15, 1
        // Predicated region
        $region13: #{tpu_custom_call.1} parent=11 // pred_check
          %p129 = pneg %p88
        $region14: #{tpu_custom_call.1} parent=11 // pred_check_branch
          %131 = sbr.rel (%p129) target = $region16
        $region15: #{tpu_custom_call.1} parent=11 // pred_region
          _
        $region16: #{tpu_custom_call.1} parent=11 // pred_fallthru
          _
      $region12: #{tpu_custom_call.1} parent=5 // pred_fallthru
        _
      %p132 = scmp.lt.s32.totalorder %s15, 4
      // Predicated region
      $region17: #{tpu_custom_call.1} parent=5 // pred_check
        %p133 = pneg %p132
      $region18: #{tpu_custom_call.1} parent=5 // pred_check_branch
        %135 = sbr.rel (%p133) target = $region20
      $region19: #{tpu_custom_call.1} parent=5 // pred_region
        // Predicated region
        $region21: #{tpu_custom_call.1} parent=19 // pred_check
          %p136 = pneg %p35
        $region22: #{tpu_custom_call.1} parent=19 // pred_check_branch
          %138 = sbr.rel (%p136) target = $region24
        $region23: #{tpu_custom_call.1} parent=19 // pred_region
          %s139 = smul.u32 2, %s15
          %p140 = scmp.lt.s32.totalorder %s139, 7
          %s141 = scalar_select %p140, %s139, 7
          %s142 = smul.addr %s141, 2
          %s143 = smul.addr %s142, 8
          %s144 = scalar_lea.vmem %s0, %s143
          %s145 = smul.u32 2, %s15
        $region24: #{tpu_custom_call.1} parent=19 // pred_fallthru
          _
        // Predicated region
        $region25: #{tpu_custom_call.1} parent=19 // pred_check
          %p146 = pneg %p61
        $region26: #{tpu_custom_call.1} parent=19 // pred_check_branch
          %148 = sbr.rel (%p146) target = $region28
        $region27: #{tpu_custom_call.1} parent=19 // pred_region
          %s149 = sand.u32 %s51, 1
          %s150 = scalar_lea.sflag [#allocation3], %s149
          %s151 = sand.u32 %s51, 1
          %s152 = smul.addr %s151, 8
          %s153 = scalar_lea.vmem [#allocation2], %s152
          %s154 = smul.u32 2, %s15
          %s156 = ssub.s32 128, 128
          %157 = vsyncadd %s150, %s156
          %s158 = smul.addr %s154, 2
          %s159 = smul.addr %s158, 32
          %s160 = scalar_lea.hbm %s1, %s159
          %s161 = sshll.u32 %s153, 4
          %s162 = int_to_ptr.vmem [resolvable:$true] %s161
          %167 = dma.hbm_to_vmem [thread:$0]  %s160, 128, %s162, %s150, 32, 32, 2
        $region28: #{tpu_custom_call.1} parent=19 // pred_fallthru
          _
      $region20: #{tpu_custom_call.1} parent=5 // pred_fallthru
        _
      %p168 = scmp.le.s32.totalorder 1, %s15
      %p169 = scmp.lt.s32.totalorder %s15, 5
      %p170 = pnand %p168, %p169
      %p171 = pneg %p170
      // Predicated region
      $region29: #{tpu_custom_call.1} parent=5 // pred_check
        _
      $region30: #{tpu_custom_call.1} parent=5 // pred_check_branch
        %173 = sbr.rel (%p170) target = $region32
      $region31: #{tpu_custom_call.1} parent=5 // pred_region
        %s174 = ssub.s32 %s15, 1
        %s175 = sand.u32 %s54, 1
        %s176 = scalar_lea.sflag [#allocation3], %s175
        %s177 = sand.u32 %s54, 1
        %s178 = smul.addr %s177, 8
        %s179 = scalar_lea.vmem [#allocation2], %s178
        // Predicated region
        $region33: #{tpu_custom_call.1} parent=31 // pred_check
          %p180 = pneg %p67
        $region34: #{tpu_custom_call.1} parent=31 // pred_check_branch
          %182 = sbr.rel (%p180) target = $region36
        $region35: #{tpu_custom_call.1} parent=31 // pred_region
          %183 = dma.done %s176, 128
        $region36: #{tpu_custom_call.1} parent=31 // pred_fallthru
          _
        %s184 = smul.u32 2, %s20
        %p185 = scmp.lt.s32.totalorder %s184, 7
        %s186 = scalar_select %p185, %s184, 7
        %s187 = smul.addr %s186, 2
        %s188 = smul.addr %s187, 8
        %s189 = scalar_lea.vmem %s0, %s188
        %p190 = pneg %p41
        %p191 = pneg %p38
        %s192 = sand.u32 %s54, 1
        %s193 = scalar_lea.sflag [#allocation3], %s192
        %s194 = sand.u32 %s54, 1
        %s195 = smul.addr %s194, 8
        %s196 = scalar_lea.vmem [#allocation2], %s195
        %p197 = pneg %p67
        %p198 = pneg %p64
        %p199 = pneg %p88
        %p200 = pneg %p85
        %p201 = pneg %p114
        %p202 = pneg %p111
        %s203 = sand.u32 %s101, 1
        %s204 = scalar_lea.sflag [#allocation4], %s203
        %s205 = sand.u32 %s101, 1
        %s206 = smul.addr %s205, 32
        %s207 = scalar_lea.vmem [#allocation5], %s206
        %s208 = smul.u32 2, %s20
        %p209 = scmp.lt.s32.totalorder %s208, 7
        %s210 = scalar_select %p209, %s208, 7
        %s211 = smul.addr %s210, 2
        %s212 = smul.addr %s211, 8
        %s213 = scalar_lea.vmem %s0, %s212
        %s214 = smul.u32 2, %s20
        %s215 = smul.u32 2, %s20
        %s216 = smul.u32 4, %s20
        %v217 = vld [vmem:[%s179] sm:$0x3]
        %v218 = vld [vmem:[%s179 + $0x2] sm:$0x3]
        %v219 = vld [vmem:[%s179 + $0x4] sm:$0x3]
        %v220 = vld [vmem:[%s179 + $0x6] sm:$0x3]
        %v221 = vunpack.c.0.s8 %v217
        %v222 = vunpack.c.0.s8 %v218
        %v223 = vunpack.c.0.s8 %v219
        %v224 = vunpack.c.0.s8 %v220
        %v225 = vcvt.s32.f32 %v221
        %v226 = vcvt.s32.f32 %v222
        %v227 = vcvt.s32.f32 %v223
        %v228 = vcvt.s32.f32 %v224
        %v229 = vld [vmem:[%s213] sm:$0xff]
        %v230 = vld [vmem:[%s213 + $0x8] sm:$0xff]
        %v231 = vld [vmem:[%s213 + $0x10] sm:$0xff]
        %v232 = vld [vmem:[%s213 + $0x18] sm:$0xff]
        %vm233 = vcmask 130048
        %v234 = vsel %vm233, %v225, 0.0
        %235 = vadd.xlane.f32.xlu0 %v234
        %v236 = vpop.xlane.xlu0 %235
        %v237 = vsel %vm233, %v226, 0.0
        %238 = vadd.xlane.f32.xlu0 %v237
        %v239 = vpop.xlane.xlu0 %238
        %v240 = vsel %vm233, %v227, 0.0
        %241 = vadd.xlane.f32.xlu0 %v240
        %v242 = vpop.xlane.xlu0 %241
        %v243 = vsel %vm233, %v228, 0.0
        %244 = vadd.xlane.f32.xlu0 %v243
        %v245 = vpop.xlane.xlu0 %244
        %v246 = vmax.f32 %v236, 1.0
        %v247 = vmax.f32 %v239, 1.0
        %v248 = vmax.f32 %v242, 1.0
        %v249 = vmax.f32 %v245, 1.0
        %v250 = vrsqrt.pop %v246
        %v251 = vrsqrt.pop %v247
        %v252 = vrsqrt.pop %v248
        %v253 = vrsqrt.pop %v249
        %v254 = vld [vmem:[%s2 + $0x38] sm:$0x1]
        %v255 = vld [vmem:[%s2 + $0x20] sm:$0xf]
        %vm256 = vcmask 31744
        %v258 = vsel %vm256, %v229, 0
        %v261 = vsel %vm256, %v230, 0
        %v264 = vsel %vm256, %v231, 0
        %v267 = vsel %vm256, %v232, 0
        %vm269 = vcmask 1043456
        %v271 = vsel %vm269, %v255, 0
        %273 = vmatprep.subr.mxu0 0.0
        %274 = vmatpush1.msra.mxu0 %v271
        %275 = vmatprep.subr.mxu0 0.0
        %276 = vmatpush1.msra.mxu0 0.0
        %277 = vmatprep.subr.mxu0 0.0
        %278 = vmatpush1.msra.mxu0 0.0
        %279 = vmatprep.subr.mxu0 0.0
        %280 = vmatpush1.msra.mxu0 0.0
        %281 = vmatprep.subr.mxu0 0.0
        %282 = vmatpush1.msra.mxu0 0.0
        %283 = vmatprep.subr.mxu0 0.0
        %284 = vmatpush1.msra.mxu0 0.0
        %285 = vmatprep.subr.mxu0 0.0
        %286 = vmatpush1.msra.mxu0 0.0
        %287 = vmatprep.subr.mxu0 0.0
        %288 = vmatpush1.msra.mxu0 0.0
        %289 = vmatprep.subr.mxu0 0.0
        %290 = vmatpush1.msra.mxu0 0.0
        %291 = vmatprep.subr.mxu0 0.0
        %292 = vmatpush1.msra.mxu0 0.0
        %293 = vmatprep.subr.mxu0 0.0
        %294 = vmatpush1.msra.mxu0 0.0
        %295 = vmatprep.subr.mxu0 0.0
        %296 = vmatpush1.msra.mxu0 0.0
        %297 = vmatprep.subr.mxu0 0.0
        %298 = vmatpush1.msra.mxu0 0.0
        %299 = vmatprep.subr.mxu0 0.0
        %300 = vmatpush1.msra.mxu0 0.0
        %301 = vmatprep.subr.mxu0 0.0
        %302 = vmatpush1.msra.mxu0 0.0
        %303 = vmatprep.subr.mxu0 0.0
        %304 = vmatpush1.msra.mxu0 0.0
        %305 = vmatprep.subr.mxu0 0.0
        %306 = vmatpush1.msra.mxu0 0.0
        %307 = vmatprep.subr.mxu0 0.0
        %308 = vmatpush1.msra.mxu0 0.0
        %309 = vmatprep.subr.mxu0 0.0
        %310 = vmatpush1.msra.mxu0 0.0
        %311 = vmatprep.subr.mxu0 0.0
        %312 = vmatpush1.msra.mxu0 0.0
        %313 = vmatprep.subr.mxu0 0.0
        %314 = vmatpush1.msra.mxu0 0.0
        %315 = vmatprep.subr.mxu0 0.0
        %316 = vmatpush1.msra.mxu0 0.0
        %317 = vmatprep.subr.mxu0 0.0
        %318 = vmatpush1.msra.mxu0 0.0
        %319 = vmatprep.subr.mxu0 0.0
        %320 = vmatpush1.msra.mxu0 0.0
        %321 = vmatprep.subr.mxu0 0.0
        %322 = vmatpush1.msra.mxu0 0.0
        %323 = vmatprep.subr.mxu0 0.0
        %324 = vmatpush1.msra.mxu0 0.0
        %325 = vmatprep.subr.mxu0 0.0
        %326 = vmatpush1.msra.mxu0 0.0
        %327 = vmatprep.subr.mxu0 0.0
        %328 = vmatpush1.msra.mxu0 0.0
        %329 = vmatprep.subr.mxu0 0.0
        %330 = vmatpush1.msra.mxu0 0.0
        %331 = vmatprep.subr.mxu0 0.0
        %332 = vmatpush1.msra.mxu0 0.0
        %333 = vmatprep.subr.mxu0 0.0
        %334 = vmatpush1.msra.mxu0 0.0
        %335 = vmatprep.subr.mxu0 0.0
        %336 = vmatpush1.msra.mxu0 0.0
        %337 = vmatprep.mubr.f32.mxu0 0.0
        %338 = vmatmul.mubr.f32.gmra.mrb[0].mxu0 %v258
        %v339 = vpop.f32.mrb[0].mxu0
        %v340 = vadd.f32 0.0, %v339
        %v341 = vpop.f32.mrb[0].mxu0
        %342 = vmatprep.mubr.f32.mxu0 0.0
        %343 = vmatmul.mubr.f32.gmra.mrb[0].mxu0 %v261
        %v344 = vpop.f32.mrb[0].mxu0
        %v345 = vadd.f32 0.0, %v344
        %v346 = vpop.f32.mrb[0].mxu0
        %347 = vmatprep.mubr.f32.mxu0 0.0
        %348 = vmatmul.mubr.f32.gmra.mrb[0].mxu0 %v264
        %v349 = vpop.f32.mrb[0].mxu0
        %v350 = vadd.f32 0.0, %v349
        %v351 = vpop.f32.mrb[0].mxu0
        %352 = vmatprep.mubr.f32.mxu0 0.0
        %353 = vmatmul.mubr.f32.gmra.mrb[0].mxu0 %v267
        %v354 = vpop.f32.mrb[0].mxu0
        %v355 = vadd.f32 0.0, %v354
        %v356 = vpop.f32.mrb[0].mxu0
        %357 = vdwg.mxu0
        %v358 = vlaneseq
        %v359 = vshrl.u32 %v358, 7
        %v360 = vsub.s32 0, %v359
        %v361 = vrot.slane %v254, %v360
        %v362 = vadd.f32 %v361, %v340
        %v363 = vadd.f32 %v361, %v345
        %v364 = vadd.f32 %v361, %v350
        %v365 = vadd.f32 %v361, %v355
        %v366 = vld [vmem:[%s2] sm:$0xf]
        %v367 = vld [vmem:[%s2 + $0x8] sm:$0x1]
        %v369 = vsel %vm269, %v366, 0
        %371 = vmatprep.subr.mxu0 0.0
        %372 = vmatpush1.msra.mxu0 %v369
        %373 = vmatprep.subr.mxu0 0.0
        %374 = vmatpush1.msra.mxu0 0.0
        %375 = vmatprep.subr.mxu0 0.0
        %376 = vmatpush1.msra.mxu0 0.0
        %377 = vmatprep.subr.mxu0 0.0
        %378 = vmatpush1.msra.mxu0 0.0
        %379 = vmatprep.subr.mxu0 0.0
        %380 = vmatpush1.msra.mxu0 0.0
        %381 = vmatprep.subr.mxu0 0.0
        %382 = vmatpush1.msra.mxu0 0.0
        %383 = vmatprep.subr.mxu0 0.0
        %384 = vmatpush1.msra.mxu0 0.0
        %385 = vmatprep.subr.mxu0 0.0
        %386 = vmatpush1.msra.mxu0 0.0
        %387 = vmatprep.subr.mxu0 0.0
        %388 = vmatpush1.msra.mxu0 0.0
        %389 = vmatprep.subr.mxu0 0.0
        %390 = vmatpush1.msra.mxu0 0.0
        %391 = vmatprep.subr.mxu0 0.0
        %392 = vmatpush1.msra.mxu0 0.0
        %393 = vmatprep.subr.mxu0 0.0
        %394 = vmatpush1.msra.mxu0 0.0
        %395 = vmatprep.subr.mxu0 0.0
        %396 = vmatpush1.msra.mxu0 0.0
        %397 = vmatprep.subr.mxu0 0.0
        %398 = vmatpush1.msra.mxu0 0.0
        %399 = vmatprep.subr.mxu0 0.0
        %400 = vmatpush1.msra.mxu0 0.0
        %401 = vmatprep.subr.mxu0 0.0
        %402 = vmatpush1.msra.mxu0 0.0
        %403 = vmatprep.subr.mxu0 0.0
        %404 = vmatpush1.msra.mxu0 0.0
        %405 = vmatprep.subr.mxu0 0.0
        %406 = vmatpush1.msra.mxu0 0.0
        %407 = vmatprep.subr.mxu0 0.0
        %408 = vmatpush1.msra.mxu0 0.0
        %409 = vmatprep.subr.mxu0 0.0
        %410 = vmatpush1.msra.mxu0 0.0
        %411 = vmatprep.subr.mxu0 0.0
        %412 = vmatpush1.msra.mxu0 0.0
        %413 = vmatprep.subr.mxu0 0.0
        %414 = vmatpush1.msra.mxu0 0.0
        %415 = vmatprep.subr.mxu0 0.0
        %416 = vmatpush1.msra.mxu0 0.0
        %417 = vmatprep.subr.mxu0 0.0
        %418 = vmatpush1.msra.mxu0 0.0
        %419 = vmatprep.subr.mxu0 0.0
        %420 = vmatpush1.msra.mxu0 0.0
        %421 = vmatprep.subr.mxu0 0.0
        %422 = vmatpush1.msra.mxu0 0.0
        %423 = vmatprep.subr.mxu0 0.0
        %424 = vmatpush1.msra.mxu0 0.0
        %425 = vmatprep.subr.mxu0 0.0
        %426 = vmatpush1.msra.mxu0 0.0
        %427 = vmatprep.subr.mxu0 0.0
        %428 = vmatpush1.msra.mxu0 0.0
        %429 = vmatprep.subr.mxu0 0.0
        %430 = vmatpush1.msra.mxu0 0.0
        %431 = vmatprep.subr.mxu0 0.0
        %432 = vmatpush1.msra.mxu0 0.0
        %433 = vmatprep.subr.mxu0 0.0
        %434 = vmatpush1.msra.mxu0 0.0
        %435 = vmatprep.mubr.f32.mxu0 0.0
        %436 = vmatmul.mubr.f32.gmra.mrb[0].mxu0 %v258
        %v437 = vpop.f32.mrb[0].mxu0
        %v438 = vadd.f32 0.0, %v437
        %v439 = vpop.f32.mrb[0].mxu0
        %440 = vmatprep.mubr.f32.mxu0 0.0
        %441 = vmatmul.mubr.f32.gmra.mrb[0].mxu0 %v261
        %v442 = vpop.f32.mrb[0].mxu0
        %v443 = vadd.f32 0.0, %v442
        %v444 = vpop.f32.mrb[0].mxu0
        %445 = vmatprep.mubr.f32.mxu0 0.0
        %446 = vmatmul.mubr.f32.gmra.mrb[0].mxu0 %v264
        %v447 = vpop.f32.mrb[0].mxu0
        %v448 = vadd.f32 0.0, %v447
        %v449 = vpop.f32.mrb[0].mxu0
        %450 = vmatprep.mubr.f32.mxu0 0.0
        %451 = vmatmul.mubr.f32.gmra.mrb[0].mxu0 %v267
        %v452 = vpop.f32.mrb[0].mxu0
        %v453 = vadd.f32 0.0, %v452
        %v454 = vpop.f32.mrb[0].mxu0
        %455 = vdwg.mxu0
        %v456 = vmul.f32 %v250, %v438
        %v457 = vmul.f32 %v251, %v443
        %v458 = vmul.f32 %v252, %v448
        %v459 = vmul.f32 %v253, %v453
        %v461 = vsel %vm233, %v225, 0
        %v464 = vsel %vm233, %v226, 0
        %466 = vmatprep.subr.mxu0 0.0
        %467 = vmatpush1.msra.mxu0 %v456
        %468 = vmatprep.subr.mxu0 0.0
        %469 = vmatpush1.msra.mxu0 %v457
        %470 = vmatprep.subr.mxu0 0.0
        %471 = vmatpush1.msra.mxu0 0.0
        %472 = vmatprep.subr.mxu0 0.0
        %473 = vmatpush1.msra.mxu0 0.0
        %474 = vmatprep.subr.mxu0 0.0
        %475 = vmatpush1.msra.mxu0 0.0
        %476 = vmatprep.subr.mxu0 0.0
        %477 = vmatpush1.msra.mxu0 0.0
        %478 = vmatprep.subr.mxu0 0.0
        %479 = vmatpush1.msra.mxu0 0.0
        %480 = vmatprep.subr.mxu0 0.0
        %481 = vmatpush1.msra.mxu0 0.0
        %482 = vmatprep.subr.mxu0 0.0
        %483 = vmatpush1.msra.mxu0 0.0
        %484 = vmatprep.subr.mxu0 0.0
        %485 = vmatpush1.msra.mxu0 0.0
        %486 = vmatprep.subr.mxu0 0.0
        %487 = vmatpush1.msra.mxu0 0.0
        %488 = vmatprep.subr.mxu0 0.0
        %489 = vmatpush1.msra.mxu0 0.0
        %490 = vmatprep.subr.mxu0 0.0
        %491 = vmatpush1.msra.mxu0 0.0
        %492 = vmatprep.subr.mxu0 0.0
        %493 = vmatpush1.msra.mxu0 0.0
        %494 = vmatprep.subr.mxu0 0.0
        %495 = vmatpush1.msra.mxu0 0.0
        %496 = vmatprep.subr.mxu0 0.0
        %497 = vmatpush1.msra.mxu0 0.0
        %498 = vmatprep.subr.mxu0 0.0
        %499 = vmatpush1.msra.mxu0 0.0
        %500 = vmatprep.subr.mxu0 0.0
        %501 = vmatpush1.msra.mxu0 0.0
        %502 = vmatprep.subr.mxu0 0.0
        %503 = vmatpush1.msra.mxu0 0.0
        %504 = vmatprep.subr.mxu0 0.0
        %505 = vmatpush1.msra.mxu0 0.0
        %506 = vmatprep.subr.mxu0 0.0
        %507 = vmatpush1.msra.mxu0 0.0
        %508 = vmatprep.subr.mxu0 0.0
        %509 = vmatpush1.msra.mxu0 0.0
        %510 = vmatprep.subr.mxu0 0.0
        %511 = vmatpush1.msra.mxu0 0.0
        %512 = vmatprep.subr.mxu0 0.0
        %513 = vmatpush1.msra.mxu0 0.0
        %514 = vmatprep.subr.mxu0 0.0
        %515 = vmatpush1.msra.mxu0 0.0
        %516 = vmatprep.subr.mxu0 0.0
        %517 = vmatpush1.msra.mxu0 0.0
        %518 = vmatprep.subr.mxu0 0.0
        %519 = vmatpush1.msra.mxu0 0.0
        %520 = vmatprep.subr.mxu0 0.0
        %521 = vmatpush1.msra.mxu0 0.0
        %522 = vmatprep.subr.mxu0 0.0
        %523 = vmatpush1.msra.mxu0 0.0
        %524 = vmatprep.subr.mxu0 0.0
        %525 = vmatpush1.msra.mxu0 0.0
        %526 = vmatprep.subr.mxu0 0.0
        %527 = vmatpush1.msra.mxu0 0.0
        %528 = vmatprep.subr.mxu0 0.0
        %529 = vmatpush1.msra.mxu0 0.0
        %530 = vmatprep.mubr.f32.mxu0 0.0
        %531 = vmatmul.mubr.f32.gmra.mrb[0].mxu0 %v461
        %v532 = vpop.f32.mrb[0].mxu0
        %v533 = vadd.f32 0.0, %v532
        %v534 = vpop.f32.mrb[0].mxu0
        %535 = vmatprep.mubr.f32.mxu0 0.0
        %536 = vmatmul.mubr.f32.gmra.mrb[0].mxu0 %v464
        %v537 = vpop.f32.mrb[0].mxu0
        %v538 = vadd.f32 0.0, %v537
        %v539 = vpop.f32.mrb[0].mxu0
        %540 = vdwg.mxu0
        %v542 = vsel %vm233, %v227, 0
        %v545 = vsel %vm233, %v228, 0
        %547 = vmatprep.subr.mxu0 0.0
        %548 = vmatpush1.msra.mxu0 %v458
        %549 = vmatprep.subr.mxu0 0.0
        %550 = vmatpush1.msra.mxu0 %v459
        %551 = vmatprep.subr.mxu0 0.0
        %552 = vmatpush1.msra.mxu0 0.0
        %553 = vmatprep.subr.mxu0 0.0
        %554 = vmatpush1.msra.mxu0 0.0
        %555 = vmatprep.subr.mxu0 0.0
        %556 = vmatpush1.msra.mxu0 0.0
        %557 = vmatprep.subr.mxu0 0.0
        %558 = vmatpush1.msra.mxu0 0.0
        %559 = vmatprep.subr.mxu0 0.0
        %560 = vmatpush1.msra.mxu0 0.0
        %561 = vmatprep.subr.mxu0 0.0
        %562 = vmatpush1.msra.mxu0 0.0
        %563 = vmatprep.subr.mxu0 0.0
        %564 = vmatpush1.msra.mxu0 0.0
        %565 = vmatprep.subr.mxu0 0.0
        %566 = vmatpush1.msra.mxu0 0.0
        %567 = vmatprep.subr.mxu0 0.0
        %568 = vmatpush1.msra.mxu0 0.0
        %569 = vmatprep.subr.mxu0 0.0
        %570 = vmatpush1.msra.mxu0 0.0
        %571 = vmatprep.subr.mxu0 0.0
        %572 = vmatpush1.msra.mxu0 0.0
        %573 = vmatprep.subr.mxu0 0.0
        %574 = vmatpush1.msra.mxu0 0.0
        %575 = vmatprep.subr.mxu0 0.0
        %576 = vmatpush1.msra.mxu0 0.0
        %577 = vmatprep.subr.mxu0 0.0
        %578 = vmatpush1.msra.mxu0 0.0
        %579 = vmatprep.subr.mxu0 0.0
        %580 = vmatpush1.msra.mxu0 0.0
        %581 = vmatprep.subr.mxu0 0.0
        %582 = vmatpush1.msra.mxu0 0.0
        %583 = vmatprep.subr.mxu0 0.0
        %584 = vmatpush1.msra.mxu0 0.0
        %585 = vmatprep.subr.mxu0 0.0
        %586 = vmatpush1.msra.mxu0 0.0
        %587 = vmatprep.subr.mxu0 0.0
        %588 = vmatpush1.msra.mxu0 0.0
        %589 = vmatprep.subr.mxu0 0.0
        %590 = vmatpush1.msra.mxu0 0.0
        %591 = vmatprep.subr.mxu0 0.0
        %592 = vmatpush1.msra.mxu0 0.0
        %593 = vmatprep.subr.mxu0 0.0
        %594 = vmatpush1.msra.mxu0 0.0
        %595 = vmatprep.subr.mxu0 0.0
        %596 = vmatpush1.msra.mxu0 0.0
        %597 = vmatprep.subr.mxu0 0.0
        %598 = vmatpush1.msra.mxu0 0.0
        %599 = vmatprep.subr.mxu0 0.0
        %600 = vmatpush1.msra.mxu0 0.0
        %601 = vmatprep.subr.mxu0 0.0
        %602 = vmatpush1.msra.mxu0 0.0
        %603 = vmatprep.subr.mxu0 0.0
        %604 = vmatpush1.msra.mxu0 0.0
        %605 = vmatprep.subr.mxu0 0.0
        %606 = vmatpush1.msra.mxu0 0.0
        %607 = vmatprep.subr.mxu0 0.0
        %608 = vmatpush1.msra.mxu0 0.0
        %609 = vmatprep.subr.mxu0 0.0
        %610 = vmatpush1.msra.mxu0 0.0
        %611 = vmatprep.mubr.f32.mxu0 0.0
        %612 = vmatmul.mubr.f32.gmra.mrb[0].mxu0 %v542
        %v613 = vpop.f32.mrb[0].mxu0
        %v614 = vadd.f32 0.0, %v613
        %v615 = vpop.f32.mrb[0].mxu0
        %616 = vmatprep.mubr.f32.mxu0 0.0
        %617 = vmatmul.mubr.f32.gmra.mrb[0].mxu0 %v545
        %v618 = vpop.f32.mrb[0].mxu0
        %v619 = vadd.f32 0.0, %v618
        %v620 = vpop.f32.mrb[0].mxu0
        %621 = vdwg.mxu0
        %v622 = vmul.f32 %v250, %v533
        %v623 = vmul.f32 %v251, %v538
        %v624 = vmul.f32 %v252, %v614
        %v625 = vmul.f32 %v253, %v619
        %v626 = vlaneseq
        %v627 = vshrl.u32 %v626, 7
        %v628 = vsub.s32 0, %v627
        %v629 = vrot.slane %v367, %v628
        %v630 = vadd.f32 %v622, %v629
        %v631 = vadd.f32 %v623, %v629
        %v632 = vadd.f32 %v624, %v629
        %v633 = vadd.f32 %v625, %v629
        %v634 = vtanh.pop %v630
        %v635 = vtanh.pop %v631
        %v636 = vtanh.pop %v632
        %v637 = vtanh.pop %v633
        %v638 = vld [vmem:[%s2 + $0x28] sm:$0xff]
        %vm639 = vcmask 64512
        %v641 = vsel %vm639, %v634, 0
        %v644 = vsel %vm639, %v635, 0
        %v647 = vsel %vm639, %v636, 0
        %v650 = vsel %vm639, %v637, 0
        %652 = vmatprep.subr.mxu0 0.0
        %653 = vmatpush1.msra.mxu0 %v638
        %654 = vmatprep.subr.mxu0 0.0
        %655 = vmatpush1.msra.mxu0 0.0
        %656 = vmatprep.subr.mxu0 0.0
        %657 = vmatpush1.msra.mxu0 0.0
        %658 = vmatprep.subr.mxu0 0.0
        %659 = vmatpush1.msra.mxu0 0.0
        %660 = vmatprep.subr.mxu0 0.0
        %661 = vmatpush1.msra.mxu0 0.0
        %662 = vmatprep.subr.mxu0 0.0
        %663 = vmatpush1.msra.mxu0 0.0
        %664 = vmatprep.subr.mxu0 0.0
        %665 = vmatpush1.msra.mxu0 0.0
        %666 = vmatprep.subr.mxu0 0.0
        %667 = vmatpush1.msra.mxu0 0.0
        %668 = vmatprep.subr.mxu0 0.0
        %669 = vmatpush1.msra.mxu0 0.0
        %670 = vmatprep.subr.mxu0 0.0
        %671 = vmatpush1.msra.mxu0 0.0
        %672 = vmatprep.subr.mxu0 0.0
        %673 = vmatpush1.msra.mxu0 0.0
        %674 = vmatprep.subr.mxu0 0.0
        %675 = vmatpush1.msra.mxu0 0.0
        %676 = vmatprep.subr.mxu0 0.0
        %677 = vmatpush1.msra.mxu0 0.0
        %678 = vmatprep.subr.mxu0 0.0
        %679 = vmatpush1.msra.mxu0 0.0
        %680 = vmatprep.subr.mxu0 0.0
        %681 = vmatpush1.msra.mxu0 0.0
        %682 = vmatprep.subr.mxu0 0.0
        %683 = vmatpush1.msra.mxu0 0.0
        %684 = vmatprep.subr.mxu0 0.0
        %685 = vmatpush1.msra.mxu0 0.0
        %686 = vmatprep.subr.mxu0 0.0
        %687 = vmatpush1.msra.mxu0 0.0
        %688 = vmatprep.subr.mxu0 0.0
        %689 = vmatpush1.msra.mxu0 0.0
        %690 = vmatprep.subr.mxu0 0.0
        %691 = vmatpush1.msra.mxu0 0.0
        %692 = vmatprep.subr.mxu0 0.0
        %693 = vmatpush1.msra.mxu0 0.0
        %694 = vmatprep.subr.mxu0 0.0
        %695 = vmatpush1.msra.mxu0 0.0
        %696 = vmatprep.subr.mxu0 0.0
        %697 = vmatpush1.msra.mxu0 0.0
        %698 = vmatprep.subr.mxu0 0.0
        %699 = vmatpush1.msra.mxu0 0.0
        %700 = vmatprep.subr.mxu0 0.0
        %701 = vmatpush1.msra.mxu0 0.0
        %702 = vmatprep.subr.mxu0 0.0
        %703 = vmatpush1.msra.mxu0 0.0
        %704 = vmatprep.subr.mxu0 0.0
        %705 = vmatpush1.msra.mxu0 0.0
        %706 = vmatprep.subr.mxu0 0.0
        %707 = vmatpush1.msra.mxu0 0.0
        %708 = vmatprep.subr.mxu0 0.0
        %709 = vmatpush1.msra.mxu0 0.0
        %710 = vmatprep.subr.mxu0 0.0
        %711 = vmatpush1.msra.mxu0 0.0
        %712 = vmatprep.subr.mxu0 0.0
        %713 = vmatpush1.msra.mxu0 0.0
        %714 = vmatprep.subr.mxu0 0.0
        %715 = vmatpush1.msra.mxu0 0.0
        %716 = vmatprep.mubr.f32.mxu0 0.0
        %717 = vmatmul.mubr.f32.gmra.mrb[0].mxu0 %v641
        %v718 = vpop.f32.mrb[0].mxu0
        %v719 = vadd.f32 0.0, %v718
        %v720 = vpop.f32.mrb[0].mxu0
        %721 = vmatprep.mubr.f32.mxu0 0.0
        %722 = vmatmul.mubr.f32.gmra.mrb[0].mxu0 %v644
        %v723 = vpop.f32.mrb[0].mxu0
        %v724 = vadd.f32 0.0, %v723
        %v725 = vpop.f32.mrb[0].mxu0
        %726 = vmatprep.mubr.f32.mxu0 0.0
        %727 = vmatmul.mubr.f32.gmra.mrb[0].mxu0 %v647
        %v728 = vpop.f32.mrb[0].mxu0
        %v729 = vadd.f32 0.0, %v728
        %v730 = vpop.f32.mrb[0].mxu0
        %731 = vmatprep.mubr.f32.mxu0 0.0
        %732 = vmatmul.mubr.f32.gmra.mrb[0].mxu0 %v650
        %v733 = vpop.f32.mrb[0].mxu0
        %v734 = vadd.f32 0.0, %v733
        %v735 = vpop.f32.mrb[0].mxu0
        %736 = vdwg.mxu0
        %v737 = vadd.f32 %v362, %v719
        %v738 = vadd.f32 %v363, %v724
        %v739 = vadd.f32 %v364, %v729
        %v740 = vadd.f32 %v365, %v734
        %v741 = vld [vmem:[%s2 + $0x10] sm:$0xff]
        %v742 = vld [vmem:[%s2 + $0x18] sm:$0x1]
        %743 = vmatprep.subr.mxu0 0.0
        %744 = vmatpush1.msra.mxu0 %v741
        %745 = vmatprep.subr.mxu0 0.0
        %746 = vmatpush1.msra.mxu0 0.0
        %747 = vmatprep.subr.mxu0 0.0
        %748 = vmatpush1.msra.mxu0 0.0
        %749 = vmatprep.subr.mxu0 0.0
        %750 = vmatpush1.msra.mxu0 0.0
        %751 = vmatprep.subr.mxu0 0.0
        %752 = vmatpush1.msra.mxu0 0.0
        %753 = vmatprep.subr.mxu0 0.0
        %754 = vmatpush1.msra.mxu0 0.0
        %755 = vmatprep.subr.mxu0 0.0
        %756 = vmatpush1.msra.mxu0 0.0
        %757 = vmatprep.subr.mxu0 0.0
        %758 = vmatpush1.msra.mxu0 0.0
        %759 = vmatprep.subr.mxu0 0.0
        %760 = vmatpush1.msra.mxu0 0.0
        %761 = vmatprep.subr.mxu0 0.0
        %762 = vmatpush1.msra.mxu0 0.0
        %763 = vmatprep.subr.mxu0 0.0
        %764 = vmatpush1.msra.mxu0 0.0
        %765 = vmatprep.subr.mxu0 0.0
        %766 = vmatpush1.msra.mxu0 0.0
        %767 = vmatprep.subr.mxu0 0.0
        %768 = vmatpush1.msra.mxu0 0.0
        %769 = vmatprep.subr.mxu0 0.0
        %770 = vmatpush1.msra.mxu0 0.0
        %771 = vmatprep.subr.mxu0 0.0
        %772 = vmatpush1.msra.mxu0 0.0
        %773 = vmatprep.subr.mxu0 0.0
        %774 = vmatpush1.msra.mxu0 0.0
        %775 = vmatprep.subr.mxu0 0.0
        %776 = vmatpush1.msra.mxu0 0.0
        %777 = vmatprep.subr.mxu0 0.0
        %778 = vmatpush1.msra.mxu0 0.0
        %779 = vmatprep.subr.mxu0 0.0
        %780 = vmatpush1.msra.mxu0 0.0
        %781 = vmatprep.subr.mxu0 0.0
        %782 = vmatpush1.msra.mxu0 0.0
        %783 = vmatprep.subr.mxu0 0.0
        %784 = vmatpush1.msra.mxu0 0.0
        %785 = vmatprep.subr.mxu0 0.0
        %786 = vmatpush1.msra.mxu0 0.0
        %787 = vmatprep.subr.mxu0 0.0
        %788 = vmatpush1.msra.mxu0 0.0
        %789 = vmatprep.subr.mxu0 0.0
        %790 = vmatpush1.msra.mxu0 0.0
        %791 = vmatprep.subr.mxu0 0.0
        %792 = vmatpush1.msra.mxu0 0.0
        %793 = vmatprep.subr.mxu0 0.0
        %794 = vmatpush1.msra.mxu0 0.0
        %795 = vmatprep.subr.mxu0 0.0
        %796 = vmatpush1.msra.mxu0 0.0
        %797 = vmatprep.subr.mxu0 0.0
        %798 = vmatpush1.msra.mxu0 0.0
        %799 = vmatprep.subr.mxu0 0.0
        %800 = vmatpush1.msra.mxu0 0.0
        %801 = vmatprep.subr.mxu0 0.0
        %802 = vmatpush1.msra.mxu0 0.0
        %803 = vmatprep.subr.mxu0 0.0
        %804 = vmatpush1.msra.mxu0 0.0
        %805 = vmatprep.subr.mxu0 0.0
        %806 = vmatpush1.msra.mxu0 0.0
        %807 = vmatprep.mubr.f32.mxu0 0.0
        %808 = vmatmul.mubr.f32.gmra.mrb[0].mxu0 %v641
        %v809 = vpop.f32.mrb[0].mxu0
        %v810 = vadd.f32 0.0, %v809
        %v811 = vpop.f32.mrb[0].mxu0
        %812 = vmatprep.mubr.f32.mxu0 0.0
        %813 = vmatmul.mubr.f32.gmra.mrb[0].mxu0 %v644
        %v814 = vpop.f32.mrb[0].mxu0
        %v815 = vadd.f32 0.0, %v814
        %v816 = vpop.f32.mrb[0].mxu0
        %817 = vmatprep.mubr.f32.mxu0 0.0
        %818 = vmatmul.mubr.f32.gmra.mrb[0].mxu0 %v647
        %v819 = vpop.f32.mrb[0].mxu0
        %v820 = vadd.f32 0.0, %v819
        %v821 = vpop.f32.mrb[0].mxu0
        %822 = vmatprep.mubr.f32.mxu0 0.0
        %823 = vmatmul.mubr.f32.gmra.mrb[0].mxu0 %v650
        %v824 = vpop.f32.mrb[0].mxu0
        %v825 = vadd.f32 0.0, %v824
        %v826 = vpop.f32.mrb[0].mxu0
        %827 = vdwg.mxu0
        %v828 = vmul.f32 %v250, %v810
        %v829 = vmul.f32 %v251, %v815
        %v830 = vmul.f32 %v252, %v820
        %v831 = vmul.f32 %v253, %v825
        %832 = vmatprep.subr.mxu0 0.0
        %833 = vmatpush1.msra.mxu0 %v828
        %834 = vmatprep.subr.mxu0 0.0
        %835 = vmatpush1.msra.mxu0 %v829
        %836 = vmatprep.subr.mxu0 0.0
        %837 = vmatpush1.msra.mxu0 0.0
        %838 = vmatprep.subr.mxu0 0.0
        %839 = vmatpush1.msra.mxu0 0.0
        %840 = vmatprep.subr.mxu0 0.0
        %841 = vmatpush1.msra.mxu0 0.0
        %842 = vmatprep.subr.mxu0 0.0
        %843 = vmatpush1.msra.mxu0 0.0
        %844 = vmatprep.subr.mxu0 0.0
        %845 = vmatpush1.msra.mxu0 0.0
        %846 = vmatprep.subr.mxu0 0.0
        %847 = vmatpush1.msra.mxu0 0.0
        %848 = vmatprep.subr.mxu0 0.0
        %849 = vmatpush1.msra.mxu0 0.0
        %850 = vmatprep.subr.mxu0 0.0
        %851 = vmatpush1.msra.mxu0 0.0
        %852 = vmatprep.subr.mxu0 0.0
        %853 = vmatpush1.msra.mxu0 0.0
        %854 = vmatprep.subr.mxu0 0.0
        %855 = vmatpush1.msra.mxu0 0.0
        %856 = vmatprep.subr.mxu0 0.0
        %857 = vmatpush1.msra.mxu0 0.0
        %858 = vmatprep.subr.mxu0 0.0
        %859 = vmatpush1.msra.mxu0 0.0
        %860 = vmatprep.subr.mxu0 0.0
        %861 = vmatpush1.msra.mxu0 0.0
        %862 = vmatprep.subr.mxu0 0.0
        %863 = vmatpush1.msra.mxu0 0.0
        %864 = vmatprep.subr.mxu0 0.0
        %865 = vmatpush1.msra.mxu0 0.0
        %866 = vmatprep.subr.mxu0 0.0
        %867 = vmatpush1.msra.mxu0 0.0
        %868 = vmatprep.subr.mxu0 0.0
        %869 = vmatpush1.msra.mxu0 0.0
        %870 = vmatprep.subr.mxu0 0.0
        %871 = vmatpush1.msra.mxu0 0.0
        %872 = vmatprep.subr.mxu0 0.0
        %873 = vmatpush1.msra.mxu0 0.0
        %874 = vmatprep.subr.mxu0 0.0
        %875 = vmatpush1.msra.mxu0 0.0
        %876 = vmatprep.subr.mxu0 0.0
        %877 = vmatpush1.msra.mxu0 0.0
        %878 = vmatprep.subr.mxu0 0.0
        %879 = vmatpush1.msra.mxu0 0.0
        %880 = vmatprep.subr.mxu0 0.0
        %881 = vmatpush1.msra.mxu0 0.0
        %882 = vmatprep.subr.mxu0 0.0
        %883 = vmatpush1.msra.mxu0 0.0
        %884 = vmatprep.subr.mxu0 0.0
        %885 = vmatpush1.msra.mxu0 0.0
        %886 = vmatprep.subr.mxu0 0.0
        %887 = vmatpush1.msra.mxu0 0.0
        %888 = vmatprep.subr.mxu0 0.0
        %889 = vmatpush1.msra.mxu0 0.0
        %890 = vmatprep.subr.mxu0 0.0
        %891 = vmatpush1.msra.mxu0 0.0
        %892 = vmatprep.subr.mxu0 0.0
        %893 = vmatpush1.msra.mxu0 0.0
        %894 = vmatprep.subr.mxu0 0.0
        %895 = vmatpush1.msra.mxu0 0.0
        %896 = vmatprep.mubr.f32.mxu0 0.0
        %897 = vmatmul.mubr.f32.gmra.mrb[0].mxu0 %v461
        %v898 = vpop.f32.mrb[0].mxu0
        %v899 = vadd.f32 0.0, %v898
        %v900 = vpop.f32.mrb[0].mxu0
        %901 = vmatprep.mubr.f32.mxu0 0.0
        %902 = vmatmul.mubr.f32.gmra.mrb[0].mxu0 %v464
        %v903 = vpop.f32.mrb[0].mxu0
        %v904 = vadd.f32 0.0, %v903
        %v905 = vpop.f32.mrb[0].mxu0
        %906 = vdwg.mxu0
        %907 = vmatprep.subr.mxu0 0.0
        %908 = vmatpush1.msra.mxu0 %v830
        %909 = vmatprep.subr.mxu0 0.0
        %910 = vmatpush1.msra.mxu0 %v831
        %911 = vmatprep.subr.mxu0 0.0
        %912 = vmatpush1.msra.mxu0 0.0
        %913 = vmatprep.subr.mxu0 0.0
        %914 = vmatpush1.msra.mxu0 0.0
        %915 = vmatprep.subr.mxu0 0.0
        %916 = vmatpush1.msra.mxu0 0.0
        %917 = vmatprep.subr.mxu0 0.0
        %918 = vmatpush1.msra.mxu0 0.0
        %919 = vmatprep.subr.mxu0 0.0
        %920 = vmatpush1.msra.mxu0 0.0
        %921 = vmatprep.subr.mxu0 0.0
        %922 = vmatpush1.msra.mxu0 0.0
        %923 = vmatprep.subr.mxu0 0.0
        %924 = vmatpush1.msra.mxu0 0.0
        %925 = vmatprep.subr.mxu0 0.0
        %926 = vmatpush1.msra.mxu0 0.0
        %927 = vmatprep.subr.mxu0 0.0
        %928 = vmatpush1.msra.mxu0 0.0
        %929 = vmatprep.subr.mxu0 0.0
        %930 = vmatpush1.msra.mxu0 0.0
        %931 = vmatprep.subr.mxu0 0.0
        %932 = vmatpush1.msra.mxu0 0.0
        %933 = vmatprep.subr.mxu0 0.0
        %934 = vmatpush1.msra.mxu0 0.0
        %935 = vmatprep.subr.mxu0 0.0
        %936 = vmatpush1.msra.mxu0 0.0
        %937 = vmatprep.subr.mxu0 0.0
        %938 = vmatpush1.msra.mxu0 0.0
        %939 = vmatprep.subr.mxu0 0.0
        %940 = vmatpush1.msra.mxu0 0.0
        %941 = vmatprep.subr.mxu0 0.0
        %942 = vmatpush1.msra.mxu0 0.0
        %943 = vmatprep.subr.mxu0 0.0
        %944 = vmatpush1.msra.mxu0 0.0
        %945 = vmatprep.subr.mxu0 0.0
        %946 = vmatpush1.msra.mxu0 0.0
        %947 = vmatprep.subr.mxu0 0.0
        %948 = vmatpush1.msra.mxu0 0.0
        %949 = vmatprep.subr.mxu0 0.0
        %950 = vmatpush1.msra.mxu0 0.0
        %951 = vmatprep.subr.mxu0 0.0
        %952 = vmatpush1.msra.mxu0 0.0
        %953 = vmatprep.subr.mxu0 0.0
        %954 = vmatpush1.msra.mxu0 0.0
        %955 = vmatprep.subr.mxu0 0.0
        %956 = vmatpush1.msra.mxu0 0.0
        %957 = vmatprep.subr.mxu0 0.0
        %958 = vmatpush1.msra.mxu0 0.0
        %959 = vmatprep.subr.mxu0 0.0
        %960 = vmatpush1.msra.mxu0 0.0
        %961 = vmatprep.subr.mxu0 0.0
        %962 = vmatpush1.msra.mxu0 0.0
        %963 = vmatprep.subr.mxu0 0.0
        %964 = vmatpush1.msra.mxu0 0.0
        %965 = vmatprep.subr.mxu0 0.0
        %966 = vmatpush1.msra.mxu0 0.0
        %967 = vmatprep.subr.mxu0 0.0
        %968 = vmatpush1.msra.mxu0 0.0
        %969 = vmatprep.subr.mxu0 0.0
        %970 = vmatpush1.msra.mxu0 0.0
        %971 = vmatprep.mubr.f32.mxu0 0.0
        %972 = vmatmul.mubr.f32.gmra.mrb[0].mxu0 %v542
        %v973 = vpop.f32.mrb[0].mxu0
        %v974 = vadd.f32 0.0, %v973
        %v975 = vpop.f32.mrb[0].mxu0
        %976 = vmatprep.mubr.f32.mxu0 0.0
        %977 = vmatmul.mubr.f32.gmra.mrb[0].mxu0 %v545
        %v978 = vpop.f32.mrb[0].mxu0
        %v979 = vadd.f32 0.0, %v978
        %v980 = vpop.f32.mrb[0].mxu0
        %981 = vdwg.mxu0
        %v982 = vmul.f32 %v250, %v899
        %v983 = vmul.f32 %v251, %v904
        %v984 = vmul.f32 %v252, %v974
        %v985 = vmul.f32 %v253, %v979
        %v986 = vlaneseq
        %v987 = vshrl.u32 %v986, 7
        %v988 = vsub.s32 0, %v987
        %v989 = vrot.slane %v742, %v988
        %v990 = vadd.f32 %v982, %v989
        %v991 = vadd.f32 %v983, %v989
        %v992 = vadd.f32 %v984, %v989
        %v993 = vadd.f32 %v985, %v989
        %v994 = vtanh.pop %v990
        %v995 = vtanh.pop %v991
        %v996 = vtanh.pop %v992
        %v997 = vtanh.pop %v993
        %v998 = vld [vmem:[%s2 + $0x30] sm:$0xff]
        %v1000 = vsel %vm639, %v994, 0
        %v1003 = vsel %vm639, %v995, 0
        %v1006 = vsel %vm639, %v996, 0
        %v1009 = vsel %vm639, %v997, 0
        %1011 = vmatprep.subr.mxu0 0.0
        %1012 = vmatpush1.msra.mxu0 %v998
        %1013 = vmatprep.subr.mxu0 0.0
        %1014 = vmatpush1.msra.mxu0 0.0
        %1015 = vmatprep.subr.mxu0 0.0
        %1016 = vmatpush1.msra.mxu0 0.0
        %1017 = vmatprep.subr.mxu0 0.0
        %1018 = vmatpush1.msra.mxu0 0.0
        %1019 = vmatprep.subr.mxu0 0.0
        %1020 = vmatpush1.msra.mxu0 0.0
        %1021 = vmatprep.subr.mxu0 0.0
        %1022 = vmatpush1.msra.mxu0 0.0
        %1023 = vmatprep.subr.mxu0 0.0
        %1024 = vmatpush1.msra.mxu0 0.0
        %1025 = vmatprep.subr.mxu0 0.0
        %1026 = vmatpush1.msra.mxu0 0.0
        %1027 = vmatprep.subr.mxu0 0.0
        %1028 = vmatpush1.msra.mxu0 0.0
        %1029 = vmatprep.subr.mxu0 0.0
        %1030 = vmatpush1.msra.mxu0 0.0
        %1031 = vmatprep.subr.mxu0 0.0
        %1032 = vmatpush1.msra.mxu0 0.0
        %1033 = vmatprep.subr.mxu0 0.0
        %1034 = vmatpush1.msra.mxu0 0.0
        %1035 = vmatprep.subr.mxu0 0.0
        %1036 = vmatpush1.msra.mxu0 0.0
        %1037 = vmatprep.subr.mxu0 0.0
        %1038 = vmatpush1.msra.mxu0 0.0
        %1039 = vmatprep.subr.mxu0 0.0
        %1040 = vmatpush1.msra.mxu0 0.0
        %1041 = vmatprep.subr.mxu0 0.0
        %1042 = vmatpush1.msra.mxu0 0.0
        %1043 = vmatprep.subr.mxu0 0.0
        %1044 = vmatpush1.msra.mxu0 0.0
        %1045 = vmatprep.subr.mxu0 0.0
        %1046 = vmatpush1.msra.mxu0 0.0
        %1047 = vmatprep.subr.mxu0 0.0
        %1048 = vmatpush1.msra.mxu0 0.0
        %1049 = vmatprep.subr.mxu0 0.0
        %1050 = vmatpush1.msra.mxu0 0.0
        %1051 = vmatprep.subr.mxu0 0.0
        %1052 = vmatpush1.msra.mxu0 0.0
        %1053 = vmatprep.subr.mxu0 0.0
        %1054 = vmatpush1.msra.mxu0 0.0
        %1055 = vmatprep.subr.mxu0 0.0
        %1056 = vmatpush1.msra.mxu0 0.0
        %1057 = vmatprep.subr.mxu0 0.0
        %1058 = vmatpush1.msra.mxu0 0.0
        %1059 = vmatprep.subr.mxu0 0.0
        %1060 = vmatpush1.msra.mxu0 0.0
        %1061 = vmatprep.subr.mxu0 0.0
        %1062 = vmatpush1.msra.mxu0 0.0
        %1063 = vmatprep.subr.mxu0 0.0
        %1064 = vmatpush1.msra.mxu0 0.0
        %1065 = vmatprep.subr.mxu0 0.0
        %1066 = vmatpush1.msra.mxu0 0.0
        %1067 = vmatprep.subr.mxu0 0.0
        %1068 = vmatpush1.msra.mxu0 0.0
        %1069 = vmatprep.subr.mxu0 0.0
        %1070 = vmatpush1.msra.mxu0 0.0
        %1071 = vmatprep.subr.mxu0 0.0
        %1072 = vmatpush1.msra.mxu0 0.0
        %1073 = vmatprep.subr.mxu0 0.0
        %1074 = vmatpush1.msra.mxu0 0.0
        %1075 = vmatprep.mubr.f32.mxu0 0.0
        %1076 = vmatmul.mubr.f32.gmra.mrb[0].mxu0 %v1000
        %v1077 = vpop.f32.mrb[0].mxu0
        %v1078 = vadd.f32 0.0, %v1077
        %v1079 = vpop.f32.mrb[0].mxu0
        %1080 = vmatprep.mubr.f32.mxu0 0.0
        %1081 = vmatmul.mubr.f32.gmra.mrb[0].mxu0 %v1003
        %v1082 = vpop.f32.mrb[0].mxu0
        %v1083 = vadd.f32 0.0, %v1082
        %v1084 = vpop.f32.mrb[0].mxu0
        %1085 = vmatprep.mubr.f32.mxu0 0.0
        %1086 = vmatmul.mubr.f32.gmra.mrb[0].mxu0 %v1006
        %v1087 = vpop.f32.mrb[0].mxu0
        %v1088 = vadd.f32 0.0, %v1087
        %v1089 = vpop.f32.mrb[0].mxu0
        %1090 = vmatprep.mubr.f32.mxu0 0.0
        %1091 = vmatmul.mubr.f32.gmra.mrb[0].mxu0 %v1009
        %v1092 = vpop.f32.mrb[0].mxu0
        %v1093 = vadd.f32 0.0, %v1092
        %v1094 = vpop.f32.mrb[0].mxu0
        %1095 = vdwg.mxu0
        %v1096 = vadd.f32 %v737, %v1078
        %v1097 = vadd.f32 %v738, %v1083
        %v1098 = vadd.f32 %v739, %v1088
        %v1099 = vadd.f32 %v740, %v1093
        %v1100 = vxor.u32 %v1096, 2147483648
        %v1101 = vxor.u32 %v1097, 2147483648
        %v1102 = vxor.u32 %v1098, 2147483648
        %v1103 = vxor.u32 %v1099, 2147483648
        %v1104 = vmul.f32 %v1100, 1.442695
        %v1105 = vpow.pop %v1104
        %v1106 = vmul.f32 %v1101, 1.442695
        %v1107 = vpow.pop %v1106
        %v1108 = vmul.f32 %v1102, 1.442695
        %v1109 = vpow.pop %v1108
        %v1110 = vmul.f32 %v1103, 1.442695
        %v1111 = vpow.pop %v1110
        %v1112 = vadd.f32 %v1105, 1.0
        %v1113 = vadd.f32 %v1107, 1.0
        %v1114 = vadd.f32 %v1109, 1.0
        %v1115 = vadd.f32 %v1111, 1.0
        %v1116 = vrcp.pop %v1112
        %v1117 = vmul.f32 1.0, %v1116
        %v1118 = vrcp.pop %v1113
        %v1119 = vmul.f32 1.0, %v1118
        %v1120 = vrcp.pop %v1114
        %v1121 = vmul.f32 1.0, %v1120
        %v1122 = vrcp.pop %v1115
        %v1123 = vmul.f32 1.0, %v1122
        %v1124 = vmul.f32 %v1096, %v1117
        %v1125 = vmul.f32 %v1097, %v1119
        %v1126 = vmul.f32 %v1098, %v1121
        %v1127 = vmul.f32 %v1099, %v1123
        %v1128 = vld [vmem:[%s2 + $0x40] sm:$0xff]
        %v1129 = vld [vmem:[%s2 + $0x48] sm:$0xff]
        %v1130 = vld [vmem:[%s2 + $0x50] sm:$0xff]
        %v1131 = vld [vmem:[%s2 + $0x58] sm:$0xff]
        %v1132 = vld [vmem:[%s2 + $0x60] sm:$0xff]
        %v1133 = vld [vmem:[%s2 + $0x68] sm:$0x1]
        %v1134 = vlaneseq
        %v1135 = vshrl.u32 %v1134, 7
        %v1136 = vsub.s32 0, %v1135
        %v1137 = vrot.slane %v1133, %v1136
        %vm1138 = vcmask 326656
        %v1140 = vsel %vm1138, %v1124, 0
        %v1143 = vsel %vm1138, %v1125, 0
        %v1146 = vsel %vm1138, %v1126, 0
        %v1149 = vsel %vm1138, %v1127, 0
        %1151 = vmatprep.subr.mxu0 0.0
        %1152 = vmatpush1.msra.mxu0 %v1128
        %1153 = vmatprep.subr.mxu0 0.0
        %1154 = vmatpush1.msra.mxu0 %v1129
        %1155 = vmatprep.subr.mxu0 0.0
        %1156 = vmatpush1.msra.mxu0 %v1130
        %1157 = vmatprep.subr.mxu0 0.0
        %1158 = vmatpush1.msra.mxu0 %v1131
        %1159 = vmatprep.subr.mxu0 0.0
        %1160 = vmatpush1.msra.mxu0 %v1132
        %1161 = vmatprep.subr.mxu0 0.0
        %1162 = vmatpush1.msra.mxu0 0.0
        %1163 = vmatprep.subr.mxu0 0.0
        %1164 = vmatpush1.msra.mxu0 0.0
        %1165 = vmatprep.subr.mxu0 0.0
        %1166 = vmatpush1.msra.mxu0 0.0
        %1167 = vmatprep.subr.mxu0 0.0
        %1168 = vmatpush1.msra.mxu0 0.0
        %1169 = vmatprep.subr.mxu0 0.0
        %1170 = vmatpush1.msra.mxu0 0.0
        %1171 = vmatprep.subr.mxu0 0.0
        %1172 = vmatpush1.msra.mxu0 0.0
        %1173 = vmatprep.subr.mxu0 0.0
        %1174 = vmatpush1.msra.mxu0 0.0
        %1175 = vmatprep.subr.mxu0 0.0
        %1176 = vmatpush1.msra.mxu0 0.0
        %1177 = vmatprep.subr.mxu0 0.0
        %1178 = vmatpush1.msra.mxu0 0.0
        %1179 = vmatprep.subr.mxu0 0.0
        %1180 = vmatpush1.msra.mxu0 0.0
        %1181 = vmatprep.subr.mxu0 0.0
        %1182 = vmatpush1.msra.mxu0 0.0
        %1183 = vmatprep.subr.mxu0 0.0
        %1184 = vmatpush1.msra.mxu0 0.0
        %1185 = vmatprep.subr.mxu0 0.0
        %1186 = vmatpush1.msra.mxu0 0.0
        %1187 = vmatprep.subr.mxu0 0.0
        %1188 = vmatpush1.msra.mxu0 0.0
        %1189 = vmatprep.subr.mxu0 0.0
        %1190 = vmatpush1.msra.mxu0 0.0
        %1191 = vmatprep.subr.mxu0 0.0
        %1192 = vmatpush1.msra.mxu0 0.0
        %1193 = vmatprep.subr.mxu0 0.0
        %1194 = vmatpush1.msra.mxu0 0.0
        %1195 = vmatprep.subr.mxu0 0.0
        %1196 = vmatpush1.msra.mxu0 0.0
        %1197 = vmatprep.subr.mxu0 0.0
        %1198 = vmatpush1.msra.mxu0 0.0
        %1199 = vmatprep.subr.mxu0 0.0
        %1200 = vmatpush1.msra.mxu0 0.0
        %1201 = vmatprep.subr.mxu0 0.0
        %1202 = vmatpush1.msra.mxu0 0.0
        %1203 = vmatprep.subr.mxu0 0.0
        %1204 = vmatpush1.msra.mxu0 0.0
        %1205 = vmatprep.subr.mxu0 0.0
        %1206 = vmatpush1.msra.mxu0 0.0
        %1207 = vmatprep.subr.mxu0 0.0
        %1208 = vmatpush1.msra.mxu0 0.0
        %1209 = vmatprep.subr.mxu0 0.0
        %1210 = vmatpush1.msra.mxu0 0.0
        %1211 = vmatprep.subr.mxu0 0.0
        %1212 = vmatpush1.msra.mxu0 0.0
        %1213 = vmatprep.subr.mxu0 0.0
        %1214 = vmatpush1.msra.mxu0 0.0
        %1215 = vmatprep.mubr.f32.mxu0 0.0
        %1216 = vmatmul.mubr.f32.gmra.mrb[0].mxu0 %v1140
        %v1217 = vpop.f32.mrb[0].mxu0
        %v1218 = vadd.f32 %v1137, %v1217
        %v1219 = vpop.f32.mrb[0].mxu0
        %1220 = vmatprep.mubr.f32.mxu0 0.0
        %1221 = vmatmul.mubr.f32.gmra.mrb[0].mxu0 %v1143
        %v1222 = vpop.f32.mrb[0].mxu0
        %v1223 = vadd.f32 %v1137, %v1222
        %v1224 = vpop.f32.mrb[0].mxu0
        %1225 = vmatprep.mubr.f32.mxu0 0.0
        %1226 = vmatmul.mubr.f32.gmra.mrb[0].mxu0 %v1146
        %v1227 = vpop.f32.mrb[0].mxu0
        %v1228 = vadd.f32 %v1137, %v1227
        %v1229 = vpop.f32.mrb[0].mxu0
        %1230 = vmatprep.mubr.f32.mxu0 0.0
        %1231 = vmatmul.mubr.f32.gmra.mrb[0].mxu0 %v1149
        %v1232 = vpop.f32.mrb[0].mxu0
        %v1233 = vadd.f32 %v1137, %v1232
        %v1234 = vpop.f32.mrb[0].mxu0
        %1235 = vdwg.mxu0
        %v1236 = vxor.u32 %v1218, 2147483648
        %v1237 = vxor.u32 %v1223, 2147483648
        %v1238 = vxor.u32 %v1228, 2147483648
        %v1239 = vxor.u32 %v1233, 2147483648
        %v1240 = vmul.f32 %v1236, 1.442695
        %v1241 = vpow.pop %v1240
        %v1242 = vmul.f32 %v1237, 1.442695
        %v1243 = vpow.pop %v1242
        %v1244 = vmul.f32 %v1238, 1.442695
        %v1245 = vpow.pop %v1244
        %v1246 = vmul.f32 %v1239, 1.442695
        %v1247 = vpow.pop %v1246
        %v1248 = vadd.f32 %v1241, 1.0
        %v1249 = vadd.f32 %v1243, 1.0
        %v1250 = vadd.f32 %v1245, 1.0
        %v1251 = vadd.f32 %v1247, 1.0
        %v1252 = vrcp.pop %v1248
        %v1253 = vmul.f32 1.0, %v1252
        %v1254 = vrcp.pop %v1249
        %v1255 = vmul.f32 1.0, %v1254
        %v1256 = vrcp.pop %v1250
        %v1257 = vmul.f32 1.0, %v1256
        %v1258 = vrcp.pop %v1251
        %v1259 = vmul.f32 1.0, %v1258
        %v1260 = vmul.f32 %v1218, %v1253
        %v1261 = vmul.f32 %v1223, %v1255
        %v1262 = vmul.f32 %v1228, %v1257
        %v1263 = vmul.f32 %v1233, %v1259
        %v1264 = vld [vmem:[%s2 + $0x70] sm:$0xff]
        %v1265 = vld [vmem:[%s2 + $0x78] sm:$0xff]
        %v1266 = vld [vmem:[%s2 + $0x80] sm:$0xff]
        %v1267 = vld [vmem:[%s2 + $0x88] sm:$0xff]
        %v1268 = vld [vmem:[%s2 + $0x90] sm:$0xff]
        %v1269 = vld [vmem:[%s2 + $0x98] sm:$0x1]
        %v1270 = vlaneseq
        %v1271 = vshrl.u32 %v1270, 7
        %v1272 = vsub.s32 0, %v1271
        %v1273 = vrot.slane %v1269, %v1272
        %v1275 = vsel %vm1138, %v1260, 0
        %v1278 = vsel %vm1138, %v1261, 0
        %v1281 = vsel %vm1138, %v1262, 0
        %v1284 = vsel %vm1138, %v1263, 0
        %1286 = vmatprep.subr.mxu0 0.0
        %1287 = vmatpush1.msra.mxu0 %v1264
        %1288 = vmatprep.subr.mxu0 0.0
        %1289 = vmatpush1.msra.mxu0 %v1265
        %1290 = vmatprep.subr.mxu0 0.0
        %1291 = vmatpush1.msra.mxu0 %v1266
        %1292 = vmatprep.subr.mxu0 0.0
        %1293 = vmatpush1.msra.mxu0 %v1267
        %1294 = vmatprep.subr.mxu0 0.0
        %1295 = vmatpush1.msra.mxu0 %v1268
        %1296 = vmatprep.subr.mxu0 0.0
        %1297 = vmatpush1.msra.mxu0 0.0
        %1298 = vmatprep.subr.mxu0 0.0
        %1299 = vmatpush1.msra.mxu0 0.0
        %1300 = vmatprep.subr.mxu0 0.0
        %1301 = vmatpush1.msra.mxu0 0.0
        %1302 = vmatprep.subr.mxu0 0.0
        %1303 = vmatpush1.msra.mxu0 0.0
        %1304 = vmatprep.subr.mxu0 0.0
        %1305 = vmatpush1.msra.mxu0 0.0
        %1306 = vmatprep.subr.mxu0 0.0
        %1307 = vmatpush1.msra.mxu0 0.0
        %1308 = vmatprep.subr.mxu0 0.0
        %1309 = vmatpush1.msra.mxu0 0.0
        %1310 = vmatprep.subr.mxu0 0.0
        %1311 = vmatpush1.msra.mxu0 0.0
        %1312 = vmatprep.subr.mxu0 0.0
        %1313 = vmatpush1.msra.mxu0 0.0
        %1314 = vmatprep.subr.mxu0 0.0
        %1315 = vmatpush1.msra.mxu0 0.0
        %1316 = vmatprep.subr.mxu0 0.0
        %1317 = vmatpush1.msra.mxu0 0.0
        %1318 = vmatprep.subr.mxu0 0.0
        %1319 = vmatpush1.msra.mxu0 0.0
        %1320 = vmatprep.subr.mxu0 0.0
        %1321 = vmatpush1.msra.mxu0 0.0
        %1322 = vmatprep.subr.mxu0 0.0
        %1323 = vmatpush1.msra.mxu0 0.0
        %1324 = vmatprep.subr.mxu0 0.0
        %1325 = vmatpush1.msra.mxu0 0.0
        %1326 = vmatprep.subr.mxu0 0.0
        %1327 = vmatpush1.msra.mxu0 0.0
        %1328 = vmatprep.subr.mxu0 0.0
        %1329 = vmatpush1.msra.mxu0 0.0
        %1330 = vmatprep.subr.mxu0 0.0
        %1331 = vmatpush1.msra.mxu0 0.0
        %1332 = vmatprep.subr.mxu0 0.0
        %1333 = vmatpush1.msra.mxu0 0.0
        %1334 = vmatprep.subr.mxu0 0.0
        %1335 = vmatpush1.msra.mxu0 0.0
        %1336 = vmatprep.subr.mxu0 0.0
        %1337 = vmatpush1.msra.mxu0 0.0
        %1338 = vmatprep.subr.mxu0 0.0
        %1339 = vmatpush1.msra.mxu0 0.0
        %1340 = vmatprep.subr.mxu0 0.0
        %1341 = vmatpush1.msra.mxu0 0.0
        %1342 = vmatprep.subr.mxu0 0.0
        %1343 = vmatpush1.msra.mxu0 0.0
        %1344 = vmatprep.subr.mxu0 0.0
        %1345 = vmatpush1.msra.mxu0 0.0
        %1346 = vmatprep.subr.mxu0 0.0
        %1347 = vmatpush1.msra.mxu0 0.0
        %1348 = vmatprep.subr.mxu0 0.0
        %1349 = vmatpush1.msra.mxu0 0.0
        %1350 = vmatprep.mubr.f32.mxu0 0.0
        %1351 = vmatmul.mubr.f32.gmra.mrb[0].mxu0 %v1275
        %v1352 = vpop.f32.mrb[0].mxu0
        %v1353 = vadd.f32 %v1273, %v1352
        %v1354 = vpop.f32.mrb[0].mxu0
        %1355 = vmatprep.mubr.f32.mxu0 0.0
        %1356 = vmatmul.mubr.f32.gmra.mrb[0].mxu0 %v1278
        %v1357 = vpop.f32.mrb[0].mxu0
        %v1358 = vadd.f32 %v1273, %v1357
        %v1359 = vpop.f32.mrb[0].mxu0
        %1360 = vmatprep.mubr.f32.mxu0 0.0
        %1361 = vmatmul.mubr.f32.gmra.mrb[0].mxu0 %v1281
        %v1362 = vpop.f32.mrb[0].mxu0
        %v1363 = vadd.f32 %v1273, %v1362
        %v1364 = vpop.f32.mrb[0].mxu0
        %1365 = vmatprep.mubr.f32.mxu0 0.0
        %1366 = vmatmul.mubr.f32.gmra.mrb[0].mxu0 %v1284
        %v1367 = vpop.f32.mrb[0].mxu0
        %v1368 = vadd.f32 %v1273, %v1367
        %v1369 = vpop.f32.mrb[0].mxu0
        %1370 = vdwg.mxu0
        %1371 = vset.pattern.permute.xlu0 4
        %1372 = vperm.xlu0 %1371, %v229
        %v1373 = vpop.permute.xlu0 %1372
        %1375 = vset.pattern.permute.xlu0 4
        %1376 = vperm.xlu0 %1375, %v230
        %v1377 = vpop.permute.xlu0 %1376
        %1379 = vset.pattern.permute.xlu0 4
        %1380 = vperm.xlu0 %1379, %v231
        %v1381 = vpop.permute.xlu0 %1380
        %1383 = vset.pattern.permute.xlu0 4
        %1384 = vperm.xlu0 %1383, %v232
        %v1385 = vpop.permute.xlu0 %1384
        %v1387 = vmul.f32 %v1353, %v1373
        %v1388 = vmul.f32 %v1358, %v1377
        %v1389 = vmul.f32 %v1363, %v1381
        %v1390 = vmul.f32 %v1368, %v1385
        %1391 = vst [vmem:[%s207] sm:$0xff] %v1387
        %1392 = vst [vmem:[%s207 + $0x8] sm:$0xff] %v1388
        %1393 = vst [vmem:[%s207 + $0x10] sm:$0xff] %v1389
        %1394 = vst [vmem:[%s207 + $0x18] sm:$0xff] %v1390
        %s1395 = sand.u32 %s101, 1
        %s1396 = scalar_lea.sflag [#allocation4], %s1395
        %s1397 = sand.u32 %s101, 1
        %s1398 = smul.addr %s1397, 32
        %s1399 = scalar_lea.vmem [#allocation5], %s1398
        // Predicated region
        $region37: #{tpu_custom_call.1} parent=31 // pred_check
          %p1400 = pneg %p111
        $region38: #{tpu_custom_call.1} parent=31 // pred_check_branch
          %1402 = sbr.rel (%p1400) target = $region40
        $region39: #{tpu_custom_call.1} parent=31 // pred_region
          %s1403 = smul.u32 4, %s20
          %s1405 = ssub.s32 512, 512
          %1406 = vsyncadd %s1396, %s1405
          %s1407 = smul.addr %s1403, 128
          %s1408 = scalar_lea.hbm %s3, %s1407
          %s1409 = sshll.u32 %s1399, 4
          %s1410 = int_to_ptr.vmem [resolvable:$true] %s1409
          %1415 = dma.vmem_to_hbm [thread:$0]  %s1410, 512, %s1408, %s1396, 128, 128, 8
        $region40: #{tpu_custom_call.1} parent=31 // pred_fallthru
          _
      $region32: #{tpu_custom_call.1} parent=5 // pred_fallthru
        _
      %p1416 = scmp.le.s32.totalorder 2, %s15
      // Predicated region
      $region41: #{tpu_custom_call.1} parent=5 // pred_check
        %p1417 = pneg %p1416
      $region42: #{tpu_custom_call.1} parent=5 // pred_check_branch
        %1419 = sbr.rel (%p1417) target = $region44
      $region43: #{tpu_custom_call.1} parent=5 // pred_region
        %s1420 = ssub.s32 %s15, 2
        // Predicated region
        $region45: #{tpu_custom_call.1} parent=43 // pred_check
          %p1421 = pneg %p117
        $region46: #{tpu_custom_call.1} parent=43 // pred_check_branch
          %1423 = sbr.rel (%p1421) target = $region48
        $region47: #{tpu_custom_call.1} parent=43 // pred_region
          %s1424 = sand.u32 %s102, 1
          %s1425 = scalar_lea.sflag [#allocation4], %s1424
          %s1426 = sand.u32 %s102, 1
          %s1427 = smul.addr %s1426, 32
          %s1428 = scalar_lea.vmem [#allocation5], %s1427
          %1429 = dma.done %s1425, 512
        $region48: #{tpu_custom_call.1} parent=43 // pred_fallthru
          _
      $region44: #{tpu_custom_call.1} parent=5 // pred_fallthru
        _
    $region6: #{tpu_custom_call.1} parent=1 // loop_footer
      %s19 = sadd.s32 1, %s15
    $region7: #{tpu_custom_call.1} parent=1 // loop_footer_branch
      %14 = sbr.rel target = $region3
    $region8: #{tpu_custom_call.1} parent=1 // loop_exit
      _
    %1430 = vsyncpa [#allocation3], 1
    %s1431 = scalar_lea.sflag [#allocation3], 1
    %1432 = vsyncpa %s1431, 1
    %1433 = vsyncpa [#allocation4], 1
    %s1434 = scalar_lea.sflag [#allocation4], 1
    %1435 = vsyncpa %s1434, 1

</llo_original>
